<compile_context>
chip_gen: v7x
topology: tpu7x:2x2x1
jax: 0.10.0
libtpu: 0.0.40
codegen_flags: <defaults>
</compile_context>

<pallas_src>
import functools

import numpy as np
import jax
import jax.numpy as jnp
from jax.experimental import pallas as pl
from jax.experimental.pallas import tpu as pltpu

# ----------------------------------------------------------------------------
# sizes (small, consistent with the module's __init__)
# ----------------------------------------------------------------------------
INPUT_SIZE = 8          # input_size (observed features)
HIDDEN_SIZE = 32        # hidden_size
P_HIDDEN = 16           # p_hidden_size
PREP_HIDDEN = 4         # prep_hidden_size
COV_SIZE = 8            # cov_size
COV_HIDDEN = 16         # cov_hidden_size
CLASS_HIDDEN = 16       # class_hidden_size
CLASS_OUT = 2           # class_output_size
BATCH = 8               # number of time series
N_OBS = 16              # number of observation events

MIXING = 1.0
CLASS_WEIGHT = 1.0
OBS_NOISE_STD = 1e-2
LOG_SQRT_2PI = 0.9189385332046727                 # log(sqrt(2*pi))
LOG_NOISE_STD = float(np.log(OBS_NOISE_STD))
INV_2VAR_NOISE = float(1.0 / (2.0 * OBS_NOISE_STD * OBS_NOISE_STD))


# ----------------------------------------------------------------------------
# weight-slab layout: all weights (bias-augmented, already fused/folded) are
# packed into one (W_ROWS, 128) f32 slab; row starts are sublane (8) aligned.
# ----------------------------------------------------------------------------
def _build_weight_layout():
    D, H, Ph = INPUT_SIZE, HIDDEN_SIZE, P_HIDDEN
    DP = INPUT_SIZE * PREP_HIDDEN
    entries = [
        ("Wcov1", COV_SIZE + 1, COV_HIDDEN),
        ("Wcov2", COV_HIDDEN + 1, H),
        ("Whm",   H + 1, Ph + 2 * H),        # [Wp1 | Whrz] merged (bias=[b_p1|0])
        ("Wfold", Ph + 1, 3 * H),            # Wp2_w @ Wx_w, biases folded
        ("Whh",   H, H),                     # no bias
        ("Wp1",   H + 1, Ph),
        ("Wp2",   Ph + 1, 2 * D),
        ("Wprep", 4 * D + 1, DP),
        ("Wi",    DP + 1, 3 * H),
        ("Wgh",   H + 1, 3 * H),
        ("Wc1",   H + 1, CLASS_HIDDEN),
        ("Wc2",   CLASS_HIDDEN + 1, CLASS_OUT),
    ]
    layout, row = {}, 0
    for name, nr, nc in entries:
        layout[name] = (row, nr, nc)
        row += -(-nr // 8) * 8               # round each block up to 8 rows
    return layout, row


W_LAYOUT, W_ROWS = _build_weight_layout()
W_COLS = 128


# ----------------------------------------------------------------------------
# The single fused forward kernel
# ----------------------------------------------------------------------------
def gru_ode_bayes_kernel(cov_ref, X_ref, M_ref, Mrep_ref, labels_ref, yobs_ref,
                         G_ref, ST_ref, W_ref,
                         hfin_ref, pred_ref, loss_ref, hs_ref, *, dt):
    D, H, Ph = INPUT_SIZE, HIDDEN_SIZE, P_HIDDEN
    B = cov_ref.shape[0]
    n_obs = X_ref.shape[0]
    num_steps = len(dt)

    def mmb(x, w_bf16):
        # MXU matmul: bf16 operands, f32 accumulation
        return jnp.dot(x.astype(jnp.bfloat16), w_bf16,
                       preferred_element_type=jnp.float32)

    def wb(name):
        r0, nr, nc = W_LAYOUT[name]
        w = W_ref[r0:r0 + nr - 1, 0:nc].astype(jnp.bfloat16)
        b = W_ref[r0 + nr - 1:r0 + nr, 0:nc]           # bias row stays f32
        return w, b

    def wmat(name):
        r0, nr, nc = W_LAYOUT[name]
        return W_ref[r0:r0 + nr, 0:nc].astype(jnp.bfloat16)

    def affine(x, wbp):
        w, b = wbp
        return mmb(x, w) + b

    # hoist every weight load / bf16 cast out of the unrolled loop
    wb_cov1, wb_cov2 = wb("Wcov1"), wb("Wcov2")
    w_hm, b_hm = wb("Whm")
    w_fold, b_fold = wb("Wfold")
    w_hh = wmat("Whh")
    wb_p1, wb_p2 = wb("Wp1"), wb("Wp2")
    wb_prep, wb_i, wb_gh = wb("Wprep"), wb("Wi"), wb("Wgh")
    wb_c1, wb_c2 = wb("Wc1"), wb("Wc2")

    def p_model(h_in):       # Linear-ReLU-Linear, mean|logvar fused in Wp2
        return affine(jax.nn.relu(affine(h_in, wb_p1)), wb_p2)

    def class_model(h_in):   # Linear-ReLU-(Dropout=id)-Linear
        return affine(jax.nn.relu(affine(h_in, wb_c1)), wb_c2)

    # ---- h0 = cov_model(cov): Linear-ReLU-(Dropout=id)-Linear-Tanh ----------
    h = jnp.tanh(affine(jax.nn.relu(affine(cov_ref[...], wb_cov1)), wb_cov2))

    # pre-broadcast the loop biases once (JAX does not CSE broadcast_in_dim)
    b_hm_b = jnp.broadcast_to(b_hm, (B, b_hm.shape[1]))
    b_fold_b = jnp.broadcast_to(b_fold, (B, b_fold.shape[1]))

    # ---- Euler integration of dh/dt = FullGRUODECell(p_model(h), h) --------
    # Fully unrolled, dt static; 3 fused matmuls per step:
    #   h @ [Wp1|Whrz], relu(ph) @ (Wp2.Wx), (r*h) @ Whh
    for t in range(num_steps):
        hs_ref[t * B:(t + 1) * B, :] = h               # snapshot h(t_all[t])
        if dt[t] == 0.0:
            continue                                   # dead dt=0 (tail) step
        hm = mmb(h, w_hm) + b_hm_b                     # (B, Ph+2H)
        ph = jax.nn.relu(hm[:, 0:Ph])
        hrz = hm[:, Ph:Ph + 2 * H]
        xg = mmb(ph, w_fold) + b_fold_b                # (B, 3H) -> [r | z | u]
        r = jax.nn.sigmoid(xg[:, 0:H] + hrz[:, 0:H])
        z = jax.nn.sigmoid(xg[:, H:2 * H] + hrz[:, H:2 * H])
        u = jnp.tanh(xg[:, 2 * H:3 * H] + mmb(r * h, w_hh))
        h = h + dt[t] * ((1.0 - z) * (u - h))

    # ---- gather pre-jump states: one-hot matmul (f32 -> exact selection) ----
    h_pre = jnp.dot(G_ref[...], hs_ref[...], preferred_element_type=jnp.float32)

    X = X_ref[...]
    Mm = M_ref[...]

    # p_pre_jump + reconstruction (negative log-likelihood) loss
    p_pre = p_model(h_pre)
    mean = p_pre[:, 0:D]
    logv = p_pre[:, D:2 * D]
    inv_sigma = jnp.exp(-0.5 * logv)
    err = (X - mean) * inv_sigma
    loss_recon = jnp.sum(0.5 * ((err * err + logv + 2.0 * LOG_SQRT_2PI) * Mm))

    # prep layer (single dense matmul) + fused nn.GRUCell update
    prep_in = jnp.concatenate([X, mean, logv, err], axis=1)          # (N, 4D)
    gi = jax.nn.relu(affine(prep_in, wb_prep)) * Mrep_ref[...]       # (N, D*P)
    ig = affine(gi, wb_i)                                            # (N, 3H)
    hg = affine(h_pre, wb_gh)                                        # (N, 3H)
    r = jax.nn.sigmoid(ig[:, 0:H] + hg[:, 0:H])
    z = jax.nn.sigmoid(ig[:, H:2 * H] + hg[:, H:2 * H])
    n = jnp.tanh(ig[:, 2 * H:3 * H] + r * hg[:, 2 * H:3 * H])
    h_post = (1.0 - z) * n + z * h_pre

    # p_post_jump + masked KL(N(mean2, exp(0.5*logv2)) || N(X, obs_noise_std))
    p_post = p_model(h_post)
    mean2 = p_post[:, 0:D]
    logv2 = p_post[:, D:2 * D]
    kl = (LOG_NOISE_STD - 0.5 * logv2
          + (jnp.exp(logv2) + (mean2 - X) ** 2) * INV_2VAR_NOISE - 0.5) * Mm
    loss_kl = jnp.sum(kl)

    # index_add_ of jump deltas as a one-hot matmul; the reference adds the
    # jump total TWICE (reproduced verbatim).
    h_jump = jnp.dot(ST_ref[...], h_post - h_pre,
                     preferred_element_type=jnp.float32)             # (B, H)
    h_final = h + 2.0 * h_jump
    hfin_ref[...] = h_final

    # both classification-head passes batched into one (n_obs + B, H) pass
    cls = class_model(jnp.concatenate([h_post, h_final], axis=0))
    pred_obs = cls[0:n_obs, :]
    pred_final = cls[n_obs:n_obs + B, :]
    pred_ref[...] = pred_final

    def bce_sum(logits, targets):   # BCEWithLogitsLoss(reduction='none').sum()
        return jnp.sum(jnp.maximum(logits, 0.0) - logits * targets
                       + jnp.log1p(jnp.exp(-jnp.abs(logits))))

    total_class_loss = (bce_sum(pred_obs, yobs_ref[...])
                        + bce_sum(pred_final, labels_ref[...]))
    total_loss = loss_recon + MIXING * loss_kl + CLASS_WEIGHT * total_class_loss

    # direct scalar stores into the (4,) SMEM loss output
    loss_ref[0] = loss_recon
    loss_ref[1] = loss_kl
    loss_ref[2] = total_class_loss
    loss_ref[3] = total_loss


# ----------------------------------------------------------------------------
# deterministic parameter init (synthetic weights) + host-side fusion/packing
# ----------------------------------------------------------------------------
def init_params(key):
    D, H, Ph, P = INPUT_SIZE, HIDDEN_SIZE, P_HIDDEN, PREP_HIDDEN
    DP = D * P
    keys = jax.random.split(key, 16)
    kit = iter(keys)

    def w(shape, scale=0.1):
        return np.asarray(scale * jax.random.normal(next(kit), shape, jnp.float32))

    def aug(W, bias=0.0):
        b = np.full((1, W.shape[1]), bias, np.float32)
        return np.concatenate([W, b], axis=0)            # bias as the last row

    p = {}
    # cov_model: Linear(cov, cov_hidden) ReLU Dropout Linear(cov_hidden, H) Tanh
    p["Wcov1"] = aug(w((COV_SIZE, COV_HIDDEN)))
    p["Wcov2"] = aug(w((COV_HIDDEN, H)))
    # p_model: Linear(H, Ph) ReLU Linear(Ph, 2D)  (mean | logvar fused)
    p["Wp1"] = aug(w((H, Ph)))
    p["Wp2"] = aug(w((Ph, 2 * D)))
    # gru_c = FullGRUODECell(2D, H): x-side gates [r|z|h]; h-side bias=False
    p["Wx"] = aug(w((2 * D, 3 * H)))
    p["Whrz"] = w((H, 2 * H))
    p["Whh"] = w((H, H))
    # gru_obs prep: per-feature (4 -> P) mixing expanded to one dense (4D, DP)
    w_prep = w((D, 4, P), scale=float(np.sqrt(2.0 / (4 + P))))
    Wd = np.zeros((4 * D, DP), np.float32)
    for k in range(4):                 # source order: [X, mean, logvar, err]
        for d in range(D):
            Wd[k * D + d, d * P:(d + 1) * P] = w_prep[d, k, :]
    p["Wprep"] = aug(Wd, bias=0.1)                         # bias_prep = 0.1
    # gru_obs nn.GRUCell(DP, H): fused gates [r|z|n], input- and hidden-side
    p["Wi"] = aug(w((DP, 3 * H)))
    p["Wgh"] = aug(w((H, 3 * H)))
    # class_model: Linear(H, Ch) ReLU Dropout Linear(Ch, Co)
    p["Wc1"] = aug(w((H, CLASS_HIDDEN)))
    p["Wc2"] = aug(w((CLASS_HIDDEN, CLASS_OUT)))
    return p


def pack_weight_slab(params):
    """Host-side weight fusion (Wp2.Wx fold, [Wp1|Whrz] merge) + one-slab pack."""
    D, H, Ph = INPUT_SIZE, HIDDEN_SIZE, P_HIDDEN
    Wp1 = np.asarray(params["Wp1"], np.float32)
    Wp2 = np.asarray(params["Wp2"], np.float32)
    Wx = np.asarray(params["Wx"], np.float32)
    Whrz = np.asarray(params["Whrz"], np.float32)

    # fold p_model's output Linear (Wp2) into the ODE cell's x-side Linear (Wx)
    Wp2_w, b_p2 = Wp2[:Ph], Wp2[Ph:Ph + 1]
    Wx_w, b_x = Wx[:2 * D], Wx[2 * D:2 * D + 1]
    Wfold = np.concatenate([Wp2_w @ Wx_w, b_p2 @ Wx_w + b_x], axis=0)  # (Ph+1, 3H)

    # merge the two h-LHS matmuls: [Wp1 | Whrz]  (Whrz has no bias)
    Whm = np.zeros((H + 1, Ph + 2 * H), np.float32)
    Whm[:H, :Ph] = Wp1[:H]
    Whm[H, :Ph] = Wp1[H]
    Whm[:H, Ph:] = Whrz

    derived = dict(params)
    derived["Wfold"] = Wfold
    derived["Whm"] = Whm

    slab = np.zeros((W_ROWS, W_COLS), np.float32)
    for name, (r0, nr, nc) in W_LAYOUT.items():
        wv = np.asarray(derived[name], np.float32)
        assert wv.shape == (nr, nc), (name, wv.shape, (nr, nc))
        slab[r0:r0 + nr, :nc] = wv
    return jnp.asarray(slab)


# ----------------------------------------------------------------------------
# cached, jitted launcher (one pallas_call; glue fused with the launch)
# ----------------------------------------------------------------------------
@functools.lru_cache(maxsize=None)
def _build_forward(dt_tuple, batch):
    num_steps = len(dt_tuple)
    kernel = functools.partial(gru_ode_bayes_kernel, dt=dt_tuple)
    vmem = pl.BlockSpec(memory_space=pltpu.MemorySpace.VMEM)
    smem = pl.BlockSpec(memory_space=pltpu.MemorySpace.SMEM)

    call = pl.pallas_call(
        kernel,
        out_shape=(
            jax.ShapeDtypeStruct((batch, HIDDEN_SIZE), jnp.float32),
            jax.ShapeDtypeStruct((batch, CLASS_OUT), jnp.float32),
            jax.ShapeDtypeStruct((4,), jnp.float32),
        ),
        in_specs=[vmem] * 9,
        out_specs=(vmem, vmem, smem),
        scratch_shapes=[pltpu.VMEM((num_steps * batch, HIDDEN_SIZE), jnp.float32)],
        compiler_params=pltpu.CompilerParams(vmem_limit_bytes=16 * 1024 * 1024),
    )

    @jax.jit
    def fwd(slab, cov, X, M, labels, obs_idx, G, ST):
        labels_obs = labels[obs_idx]                       # (N_obs, class_out)
        M_rep = jnp.repeat(M, PREP_HIDDEN, axis=1)         # (N_obs, D*prep)
        return call(cov, X, M, M_rep, labels, labels_obs, G, ST, slab)

    return fwd


# ----------------------------------------------------------------------------
# full forward pass (mirrors GRUODEBayes.forward)
# ----------------------------------------------------------------------------
def gru_ode_bayes_forward(weight_slab, times, X, M, obs_idx, obs_to_time_idx,
                          cov, T, labels):
    # ---- host-side time-grid construction (static; mirrors the torch code) --
    times_np = np.asarray(times, np.float64)
    t_all = np.unique(np.concatenate([np.array([0.0]), times_np]))
    assert np.all(np.diff(t_all) > 0), "t_all is not strictly increasing!"
    num_steps = int(t_all.shape[0])
    # TODO(synk): for T > t_all[-1] the reference integrates the tail with
    # torchdiffeq's adaptive solver; approximated here by one Euler step of
    # size (T - t_all[-1]) (skipped entirely when T == t_all[-1]).
    tail_dt = max(float(T) - float(t_all[-1]), 0.0)
    dt_full = np.concatenate([np.diff(t_all), np.array([tail_dt])])

    offset = 1 if (t_all[0] == 0.0 and times_np[0] != 0.0) else 0
    time_idx = np.asarray(obs_to_time_idx, np.int64) + offset
    obs_idx_np = np.asarray(obs_idx, np.int64)

    B = int(cov.shape[0])
    n_obs = int(X.shape[0])

    # one-hot gather / scatter matrices (host built, tiny): dynamic indexing
    # becomes two MXU matmuls inside the kernel.
    G = np.zeros((n_obs, num_steps * B), np.float32)
    G[np.arange(n_obs), time_idx * B + obs_idx_np] = 1.0          # h_pre gather
    ST = np.zeros((B, n_obs), np.float32)
    ST[obs_idx_np, np.arange(n_obs)] = 1.0                        # index_add_

    fwd = _build_forward(tuple(float(d) for d in dt_full), B)
    h_final, final_pred, losses = fwd(
        weight_slab, cov, X, M, labels,
        jnp.asarray(obs_idx_np, jnp.int32), G, ST)

    total_loss = losses[3]
    total_class_loss = losses[2]
    return h_final, total_loss, final_pred, total_class_loss


# ----------------------------------------------------------------------------
if __name__ == "__main__":
    key = jax.random.PRNGKey(0)
    k_par, k_x, k_m, k_oidx, k_tidx, k_cov, k_lab = jax.random.split(key, 7)

    weight_slab = pack_weight_slab(init_params(k_par))

    times = np.array([0.1, 0.25, 0.4, 0.6, 0.85], np.float32)     # strictly increasing, > 0
    time_ptr = np.arange(len(times) + 1, dtype=np.int32)           # unused by forward (as in reference)
    X = jax.random.normal(k_x, (N_OBS, INPUT_SIZE), jnp.float32)
    M = (jax.random.uniform(k_m, (N_OBS, INPUT_SIZE)) > 0.3).astype(jnp.float32)
    obs_idx = np.asarray(jax.random.randint(k_oidx, (N_OBS,), 0, BATCH), np.int32)
    obs_to_time_idx = np.asarray(
        jax.random.randint(k_tidx, (N_OBS,), 0, len(times)), np.int32)
    cov = jax.random.normal(k_cov, (BATCH, COV_SIZE), jnp.float32)
    labels = (jax.random.uniform(k_lab, (BATCH, CLASS_OUT)) > 0.5).astype(jnp.float32)
    T = float(times[-1])                                           # no tail integration

    h_final, total_loss, final_pred, total_class_loss = gru_ode_bayes_forward(
        weight_slab, times, X, M, obs_idx, obs_to_time_idx, cov, T, labels)

    jax.block_until_ready((h_final, total_loss, final_pred, total_class_loss))
    assert h_final.shape == (BATCH, HIDDEN_SIZE)
    assert final_pred.shape == (BATCH, CLASS_OUT)
    assert np.isfinite(float(total_loss)) and np.isfinite(float(total_class_loss))
    print("KERNEL_OK")
</pallas_src>

<mosaic_0001>
module attributes {stable_mosaic.version = 11 : i64} {
  func.func @gru_ode_bayes_kernel(%arg0: memref<8x8xf32, #tpu.memory_space<vmem>>, %arg1: memref<16x8xf32, #tpu.memory_space<vmem>>, %arg2: memref<16x8xf32, #tpu.memory_space<vmem>>, %arg3: memref<16x32xf32, #tpu.memory_space<vmem>>, %arg4: memref<8x2xf32, #tpu.memory_space<vmem>>, %arg5: memref<16x2xf32, #tpu.memory_space<vmem>>, %arg6: memref<16x48xf32, #tpu.memory_space<vmem>>, %arg7: memref<8x16xf32, #tpu.memory_space<vmem>>, %arg8: memref<384x128xf32, #tpu.memory_space<vmem>>, %arg9: memref<8x32xf32, #tpu.memory_space<vmem>>, %arg10: memref<8x2xf32, #tpu.memory_space<vmem>>, %arg11: memref<4xf32, #tpu.memory_space<smem>>, %arg12: memref<48x32xf32, #tpu.memory_space<vmem>>) attributes {dimension_semantics = [], scalar_prefetch = 0 : i64, scratch_operands = 1 : i64, tpu.core_type = #tpu.core_type<tc>} {
    %c0 = arith.constant 0 : index
    %c0_0 = arith.constant 0 : index
    %0 = vector.load %arg8[%c0, %c0_0] : memref<384x128xf32, #tpu.memory_space<vmem>>, vector<8x16xf32>
    %1 = arith.truncf %0 : vector<8x16xf32> to vector<8x16xbf16>
    %c8 = arith.constant 8 : index
    %c0_1 = arith.constant 0 : index
    %2 = vector.load %arg8[%c8, %c0_1] : memref<384x128xf32, #tpu.memory_space<vmem>>, vector<1x16xf32>
    %c16 = arith.constant 16 : index
    %c0_2 = arith.constant 0 : index
    %3 = vector.load %arg8[%c16, %c0_2] : memref<384x128xf32, #tpu.memory_space<vmem>>, vector<16x32xf32>
    %4 = arith.truncf %3 : vector<16x32xf32> to vector<16x32xbf16>
    %c32 = arith.constant 32 : index
    %c0_3 = arith.constant 0 : index
    %5 = vector.load %arg8[%c32, %c0_3] : memref<384x128xf32, #tpu.memory_space<vmem>>, vector<1x32xf32>
    %c40 = arith.constant 40 : index
    %c0_4 = arith.constant 0 : index
    %6 = vector.load %arg8[%c40, %c0_4] : memref<384x128xf32, #tpu.memory_space<vmem>>, vector<32x80xf32>
    %7 = arith.truncf %6 : vector<32x80xf32> to vector<32x80xbf16>
    %c72 = arith.constant 72 : index
    %c0_5 = arith.constant 0 : index
    %8 = vector.load %arg8[%c72, %c0_5] : memref<384x128xf32, #tpu.memory_space<vmem>>, vector<1x80xf32>
    %c80 = arith.constant 80 : index
    %c0_6 = arith.constant 0 : index
    %9 = vector.load %arg8[%c80, %c0_6] : memref<384x128xf32, #tpu.memory_space<vmem>>, vector<16x96xf32>
    %10 = arith.truncf %9 : vector<16x96xf32> to vector<16x96xbf16>
    %c96 = arith.constant 96 : index
    %c0_7 = arith.constant 0 : index
    %11 = vector.load %arg8[%c96, %c0_7] : memref<384x128xf32, #tpu.memory_space<vmem>>, vector<1x96xf32>
    %c104 = arith.constant 104 : index
    %c0_8 = arith.constant 0 : index
    %12 = vector.load %arg8[%c104, %c0_8] : memref<384x128xf32, #tpu.memory_space<vmem>>, vector<32x32xf32>
    %13 = arith.truncf %12 : vector<32x32xf32> to vector<32x32xbf16>
    %c136 = arith.constant 136 : index
    %c0_9 = arith.constant 0 : index
    %14 = vector.load %arg8[%c136, %c0_9] : memref<384x128xf32, #tpu.memory_space<vmem>>, vector<32x16xf32>
    %15 = arith.truncf %14 : vector<32x16xf32> to vector<32x16xbf16>
    %c168 = arith.constant 168 : index
    %c0_10 = arith.constant 0 : index
    %16 = vector.load %arg8[%c168, %c0_10] : memref<384x128xf32, #tpu.memory_space<vmem>>, vector<1x16xf32>
    %c176 = arith.constant 176 : index
    %c0_11 = arith.constant 0 : index
    %17 = vector.load %arg8[%c176, %c0_11] : memref<384x128xf32, #tpu.memory_space<vmem>>, vector<16x16xf32>
    %18 = arith.truncf %17 : vector<16x16xf32> to vector<16x16xbf16>
    %c192 = arith.constant 192 : index
    %c0_12 = arith.constant 0 : index
    %19 = vector.load %arg8[%c192, %c0_12] : memref<384x128xf32, #tpu.memory_space<vmem>>, vector<1x16xf32>
    %c200 = arith.constant 200 : index
    %c0_13 = arith.constant 0 : index
    %20 = vector.load %arg8[%c200, %c0_13] : memref<384x128xf32, #tpu.memory_space<vmem>>, vector<32x32xf32>
    %21 = arith.truncf %20 : vector<32x32xf32> to vector<32x32xbf16>
    %c232 = arith.constant 232 : index
    %c0_14 = arith.constant 0 : index
    %22 = vector.load %arg8[%c232, %c0_14] : memref<384x128xf32, #tpu.memory_space<vmem>>, vector<1x32xf32>
    %c240 = arith.constant 240 : index
    %c0_15 = arith.constant 0 : index
    %23 = vector.load %arg8[%c240, %c0_15] : memref<384x128xf32, #tpu.memory_space<vmem>>, vector<32x96xf32>
    %24 = arith.truncf %23 : vector<32x96xf32> to vector<32x96xbf16>
    %c272 = arith.constant 272 : index
    %c0_16 = arith.constant 0 : index
    %25 = vector.load %arg8[%c272, %c0_16] : memref<384x128xf32, #tpu.memory_space<vmem>>, vector<1x96xf32>
    %c280 = arith.constant 280 : index
    %c0_17 = arith.constant 0 : index
    %26 = vector.load %arg8[%c280, %c0_17] : memref<384x128xf32, #tpu.memory_space<vmem>>, vector<32x96xf32>
    %27 = arith.truncf %26 : vector<32x96xf32> to vector<32x96xbf16>
    %c312 = arith.constant 312 : index
    %c0_18 = arith.constant 0 : index
    %28 = vector.load %arg8[%c312, %c0_18] : memref<384x128xf32, #tpu.memory_space<vmem>>, vector<1x96xf32>
    %c320 = arith.constant 320 : index
    %c0_19 = arith.constant 0 : index
    %29 = vector.load %arg8[%c320, %c0_19] : memref<384x128xf32, #tpu.memory_space<vmem>>, vector<32x16xf32>
    %30 = arith.truncf %29 : vector<32x16xf32> to vector<32x16xbf16>
    %c352 = arith.constant 352 : index
    %c0_20 = arith.constant 0 : index
    %31 = vector.load %arg8[%c352, %c0_20] : memref<384x128xf32, #tpu.memory_space<vmem>>, vector<1x16xf32>
    %c360 = arith.constant 360 : index
    %c0_21 = arith.constant 0 : index
    %32 = vector.load %arg8[%c360, %c0_21] : memref<384x128xf32, #tpu.memory_space<vmem>>, vector<16x2xf32>
    %33 = arith.truncf %32 : vector<16x2xf32> to vector<16x2xbf16>
    %c376 = arith.constant 376 : index
    %c0_22 = arith.constant 0 : index
    %34 = vector.load %arg8[%c376, %c0_22] : memref<384x128xf32, #tpu.memory_space<vmem>>, vector<1x2xf32>
    %c0_23 = arith.constant 0 : index
    %c0_24 = arith.constant 0 : index
    %35 = vector.load %arg0[%c0_23, %c0_24] : memref<8x8xf32, #tpu.memory_space<vmem>>, vector<8x8xf32>
    %36 = arith.truncf %35 : vector<8x8xf32> to vector<8x8xbf16>
    %cst = arith.constant dense<0.000000e+00> : vector<8x16xf32>
    %37 = tpu.matmul %36, %1, %cst {dimension_numbers = #tpu.dot_dimension_numbers<[1], [0], [0], [1], [0, 0, 1, 1], [], []>} : vector<8x8xbf16>, vector<8x16xbf16>, vector<8x16xf32> -> vector<8x16xf32>
    %38 = vector.broadcast %2 : vector<1x16xf32> to vector<8x16xf32>
    %39 = arith.addf %37, %38 : vector<8x16xf32>
    %cst_25 = arith.constant 0.000000e+00 : f32
    %40 = vector.broadcast %cst_25 : f32 to vector<8x16xf32>
    %41 = arith.maximumf %39, %40 : vector<8x16xf32>
    %42 = arith.truncf %41 : vector<8x16xf32> to vector<8x16xbf16>
    %cst_26 = arith.constant dense<0.000000e+00> : vector<8x32xf32>
    %43 = tpu.matmul %42, %4, %cst_26 {dimension_numbers = #tpu.dot_dimension_numbers<[1], [0], [0], [1], [0, 0, 1, 1], [], []>} : vector<8x16xbf16>, vector<16x32xbf16>, vector<8x32xf32> -> vector<8x32xf32>
    %44 = vector.broadcast %5 : vector<1x32xf32> to vector<8x32xf32>
    %45 = arith.addf %43, %44 : vector<8x32xf32>
    %46 = math.tanh %45 : vector<8x32xf32>
    %47 = vector.shape_cast %8 : vector<1x80xf32> to vector<1x80xf32>
    %48 = vector.broadcast %47 : vector<1x80xf32> to vector<8x80xf32>
    %49 = vector.shape_cast %11 : vector<1x96xf32> to vector<1x96xf32>
    %50 = vector.broadcast %49 : vector<1x96xf32> to vector<8x96xf32>
    %c0_27 = arith.constant 0 : index
    %c0_28 = arith.constant 0 : index
    %51 = vector.load %arg12[%c0_27, %c0_28] : memref<48x32xf32, #tpu.memory_space<vmem>>, vector<8x32xf32>
    tpu.vector_store %arg12[%c0_27, %c0_28], %46 {strides = array<i32>} : memref<48x32xf32, #tpu.memory_space<vmem>>, vector<8x32xf32>,
    %52 = arith.truncf %46 : vector<8x32xf32> to vector<8x32xbf16>
    %cst_29 = arith.constant dense<0.000000e+00> : vector<8x80xf32>
    %53 = tpu.matmul %52, %7, %cst_29 {dimension_numbers = #tpu.dot_dimension_numbers<[1], [0], [0], [1], [0, 0, 1, 1], [], []>} : vector<8x32xbf16>, vector<32x80xbf16>, vector<8x80xf32> -> vector<8x80xf32>
    %54 = arith.addf %53, %48 : vector<8x80xf32>
    %55 = vector.extract_strided_slice %54 {offsets = [0, 0], sizes = [8, 16], strides = [1, 1]} : vector<8x80xf32> to vector<8x16xf32>
    %cst_30 = arith.constant 0.000000e+00 : f32
    %56 = vector.broadcast %cst_30 : f32 to vector<8x16xf32>
    %57 = arith.maximumf %55, %56 : vector<8x16xf32>
    %58 = vector.extract_strided_slice %54 {offsets = [0, 16], sizes = [8, 64], strides = [1, 1]} : vector<8x80xf32> to vector<8x64xf32>
    %59 = arith.truncf %57 : vector<8x16xf32> to vector<8x16xbf16>
    %cst_31 = arith.constant dense<0.000000e+00> : vector<8x96xf32>
    %60 = tpu.matmul %59, %10, %cst_31 {dimension_numbers = #tpu.dot_dimension_numbers<[1], [0], [0], [1], [0, 0, 1, 1], [], []>} : vector<8x16xbf16>, vector<16x96xbf16>, vector<8x96xf32> -> vector<8x96xf32>
    %61 = arith.addf %60, %50 : vector<8x96xf32>
    %62 = vector.extract_strided_slice %61 {offsets = [0, 0], sizes = [8, 32], strides = [1, 1]} : vector<8x96xf32> to vector<8x32xf32>
    %63 = vector.extract_strided_slice %58 {offsets = [0, 0], sizes = [8, 32], strides = [1, 1]} : vector<8x64xf32> to vector<8x32xf32>
    %64 = arith.addf %62, %63 : vector<8x32xf32>
    %65 = arith.negf %64 : vector<8x32xf32>
    %66 = math.exp %65 : vector<8x32xf32>
    %cst_32 = arith.constant 1.000000e+00 : f32
    %67 = vector.broadcast %cst_32 : f32 to vector<8x32xf32>
    %68 = arith.addf %67, %66 : vector<8x32xf32>
    %69 = arith.divf %67, %68 : vector<8x32xf32>
    %70 = vector.extract_strided_slice %61 {offsets = [0, 32], sizes = [8, 32], strides = [1, 1]} : vector<8x96xf32> to vector<8x32xf32>
    %71 = vector.extract_strided_slice %58 {offsets = [0, 32], sizes = [8, 32], strides = [1, 1]} : vector<8x64xf32> to vector<8x32xf32>
    %72 = arith.addf %70, %71 : vector<8x32xf32>
    %73 = arith.negf %72 : vector<8x32xf32>
    %74 = math.exp %73 : vector<8x32xf32>
    %cst_33 = arith.constant 1.000000e+00 : f32
    %75 = vector.broadcast %cst_33 : f32 to vector<8x32xf32>
    %76 = arith.addf %75, %74 : vector<8x32xf32>
    %77 = arith.divf %75, %76 : vector<8x32xf32>
    %78 = vector.extract_strided_slice %61 {offsets = [0, 64], sizes = [8, 32], strides = [1, 1]} : vector<8x96xf32> to vector<8x32xf32>
    %79 = arith.mulf %69, %46 : vector<8x32xf32>
    %80 = arith.truncf %79 : vector<8x32xf32> to vector<8x32xbf16>
    %cst_34 = arith.constant dense<0.000000e+00> : vector<8x32xf32>
    %81 = tpu.matmul %80, %13, %cst_34 {dimension_numbers = #tpu.dot_dimension_numbers<[1], [0], [0], [1], [0, 0, 1, 1], [], []>} : vector<8x32xbf16>, vector<32x32xbf16>, vector<8x32xf32> -> vector<8x32xf32>
    %82 = arith.addf %78, %81 : vector<8x32xf32>
    %83 = math.tanh %82 : vector<8x32xf32>
    %cst_35 = arith.constant 1.000000e+00 : f32
    %84 = vector.broadcast %cst_35 : f32 to vector<8x32xf32>
    %85 = arith.subf %84, %77 : vector<8x32xf32>
    %86 = arith.subf %83, %46 : vector<8x32xf32>
    %87 = arith.mulf %85, %86 : vector<8x32xf32>
    %cst_36 = arith.constant 1.000000e-01 : f32
    %88 = vector.broadcast %cst_36 : f32 to vector<8x32xf32>
    %89 = arith.mulf %88, %87 : vector<8x32xf32>
    %90 = arith.addf %46, %89 : vector<8x32xf32>
    %c8_37 = arith.constant 8 : index
    %c0_38 = arith.constant 0 : index
    %91 = vector.load %arg12[%c8_37, %c0_38] : memref<48x32xf32, #tpu.memory_space<vmem>>, vector<8x32xf32>
    tpu.vector_store %arg12[%c8_37, %c0_38], %90 {strides = array<i32>} : memref<48x32xf32, #tpu.memory_space<vmem>>, vector<8x32xf32>,
    %92 = arith.truncf %90 : vector<8x32xf32> to vector<8x32xbf16>
    %cst_39 = arith.constant dense<0.000000e+00> : vector<8x80xf32>
    %93 = tpu.matmul %92, %7, %cst_39 {dimension_numbers = #tpu.dot_dimension_numbers<[1], [0], [0], [1], [0, 0, 1, 1], [], []>} : vector<8x32xbf16>, vector<32x80xbf16>, vector<8x80xf32> -> vector<8x80xf32>
    %94 = arith.addf %93, %48 : vector<8x80xf32>
    %95 = vector.extract_strided_slice %94 {offsets = [0, 0], sizes = [8, 16], strides = [1, 1]} : vector<8x80xf32> to vector<8x16xf32>
    %cst_40 = arith.constant 0.000000e+00 : f32
    %96 = vector.broadcast %cst_40 : f32 to vector<8x16xf32>
    %97 = arith.maximumf %95, %96 : vector<8x16xf32>
    %98 = vector.extract_strided_slice %94 {offsets = [0, 16], sizes = [8, 64], strides = [1, 1]} : vector<8x80xf32> to vector<8x64xf32>
    %99 = arith.truncf %97 : vector<8x16xf32> to vector<8x16xbf16>
    %cst_41 = arith.constant dense<0.000000e+00> : vector<8x96xf32>
    %100 = tpu.matmul %99, %10, %cst_41 {dimension_numbers = #tpu.dot_dimension_numbers<[1], [0], [0], [1], [0, 0, 1, 1], [], []>} : vector<8x16xbf16>, vector<16x96xbf16>, vector<8x96xf32> -> vector<8x96xf32>
    %101 = arith.addf %100, %50 : vector<8x96xf32>
    %102 = vector.extract_strided_slice %101 {offsets = [0, 0], sizes = [8, 32], strides = [1, 1]} : vector<8x96xf32> to vector<8x32xf32>
    %103 = vector.extract_strided_slice %98 {offsets = [0, 0], sizes = [8, 32], strides = [1, 1]} : vector<8x64xf32> to vector<8x32xf32>
    %104 = arith.addf %102, %103 : vector<8x32xf32>
    %105 = arith.negf %104 : vector<8x32xf32>
    %106 = math.exp %105 : vector<8x32xf32>
    %cst_42 = arith.constant 1.000000e+00 : f32
    %107 = vector.broadcast %cst_42 : f32 to vector<8x32xf32>
    %108 = arith.addf %107, %106 : vector<8x32xf32>
    %109 = arith.divf %107, %108 : vector<8x32xf32>
    %110 = vector.extract_strided_slice %101 {offsets = [0, 32], sizes = [8, 32], strides = [1, 1]} : vector<8x96xf32> to vector<8x32xf32>
    %111 = vector.extract_strided_slice %98 {offsets = [0, 32], sizes = [8, 32], strides = [1, 1]} : vector<8x64xf32> to vector<8x32xf32>
    %112 = arith.addf %110, %111 : vector<8x32xf32>
    %113 = arith.negf %112 : vector<8x32xf32>
    %114 = math.exp %113 : vector<8x32xf32>
    %cst_43 = arith.constant 1.000000e+00 : f32
    %115 = vector.broadcast %cst_43 : f32 to vector<8x32xf32>
    %116 = arith.addf %115, %114 : vector<8x32xf32>
    %117 = arith.divf %115, %116 : vector<8x32xf32>
    %118 = vector.extract_strided_slice %101 {offsets = [0, 64], sizes = [8, 32], strides = [1, 1]} : vector<8x96xf32> to vector<8x32xf32>
    %119 = arith.mulf %109, %90 : vector<8x32xf32>
    %120 = arith.truncf %119 : vector<8x32xf32> to vector<8x32xbf16>
    %cst_44 = arith.constant dense<0.000000e+00> : vector<8x32xf32>
    %121 = tpu.matmul %120, %13, %cst_44 {dimension_numbers = #tpu.dot_dimension_numbers<[1], [0], [0], [1], [0, 0, 1, 1], [], []>} : vector<8x32xbf16>, vector<32x32xbf16>, vector<8x32xf32> -> vector<8x32xf32>
    %122 = arith.addf %118, %121 : vector<8x32xf32>
    %123 = math.tanh %122 : vector<8x32xf32>
    %cst_45 = arith.constant 1.000000e+00 : f32
    %124 = vector.broadcast %cst_45 : f32 to vector<8x32xf32>
    %125 = arith.subf %124, %117 : vector<8x32xf32>
    %126 = arith.subf %123, %90 : vector<8x32xf32>
    %127 = arith.mulf %125, %126 : vector<8x32xf32>
    %cst_46 = arith.constant 1.500000e-01 : f32
    %128 = vector.broadcast %cst_46 : f32 to vector<8x32xf32>
    %129 = arith.mulf %128, %127 : vector<8x32xf32>
    %130 = arith.addf %90, %129 : vector<8x32xf32>
    %c16_47 = arith.constant 16 : index
    %c0_48 = arith.constant 0 : index
    %131 = vector.load %arg12[%c16_47, %c0_48] : memref<48x32xf32, #tpu.memory_space<vmem>>, vector<8x32xf32>
    tpu.vector_store %arg12[%c16_47, %c0_48], %130 {strides = array<i32>} : memref<48x32xf32, #tpu.memory_space<vmem>>, vector<8x32xf32>,
    %132 = arith.truncf %130 : vector<8x32xf32> to vector<8x32xbf16>
    %cst_49 = arith.constant dense<0.000000e+00> : vector<8x80xf32>
    %133 = tpu.matmul %132, %7, %cst_49 {dimension_numbers = #tpu.dot_dimension_numbers<[1], [0], [0], [1], [0, 0, 1, 1], [], []>} : vector<8x32xbf16>, vector<32x80xbf16>, vector<8x80xf32> -> vector<8x80xf32>
    %134 = arith.addf %133, %48 : vector<8x80xf32>
    %135 = vector.extract_strided_slice %134 {offsets = [0, 0], sizes = [8, 16], strides = [1, 1]} : vector<8x80xf32> to vector<8x16xf32>
    %cst_50 = arith.constant 0.000000e+00 : f32
    %136 = vector.broadcast %cst_50 : f32 to vector<8x16xf32>
    %137 = arith.maximumf %135, %136 : vector<8x16xf32>
    %138 = vector.extract_strided_slice %134 {offsets = [0, 16], sizes = [8, 64], strides = [1, 1]} : vector<8x80xf32> to vector<8x64xf32>
    %139 = arith.truncf %137 : vector<8x16xf32> to vector<8x16xbf16>
    %cst_51 = arith.constant dense<0.000000e+00> : vector<8x96xf32>
    %140 = tpu.matmul %139, %10, %cst_51 {dimension_numbers = #tpu.dot_dimension_numbers<[1], [0], [0], [1], [0, 0, 1, 1], [], []>} : vector<8x16xbf16>, vector<16x96xbf16>, vector<8x96xf32> -> vector<8x96xf32>
    %141 = arith.addf %140, %50 : vector<8x96xf32>
    %142 = vector.extract_strided_slice %141 {offsets = [0, 0], sizes = [8, 32], strides = [1, 1]} : vector<8x96xf32> to vector<8x32xf32>
    %143 = vector.extract_strided_slice %138 {offsets = [0, 0], sizes = [8, 32], strides = [1, 1]} : vector<8x64xf32> to vector<8x32xf32>
    %144 = arith.addf %142, %143 : vector<8x32xf32>
    %145 = arith.negf %144 : vector<8x32xf32>
    %146 = math.exp %145 : vector<8x32xf32>
    %cst_52 = arith.constant 1.000000e+00 : f32
    %147 = vector.broadcast %cst_52 : f32 to vector<8x32xf32>
    %148 = arith.addf %147, %146 : vector<8x32xf32>
    %149 = arith.divf %147, %148 : vector<8x32xf32>
    %150 = vector.extract_strided_slice %141 {offsets = [0, 32], sizes = [8, 32], strides = [1, 1]} : vector<8x96xf32> to vector<8x32xf32>
    %151 = vector.extract_strided_slice %138 {offsets = [0, 32], sizes = [8, 32], strides = [1, 1]} : vector<8x64xf32> to vector<8x32xf32>
    %152 = arith.addf %150, %151 : vector<8x32xf32>
    %153 = arith.negf %152 : vector<8x32xf32>
    %154 = math.exp %153 : vector<8x32xf32>
    %cst_53 = arith.constant 1.000000e+00 : f32
    %155 = vector.broadcast %cst_53 : f32 to vector<8x32xf32>
    %156 = arith.addf %155, %154 : vector<8x32xf32>
    %157 = arith.divf %155, %156 : vector<8x32xf32>
    %158 = vector.extract_strided_slice %141 {offsets = [0, 64], sizes = [8, 32], strides = [1, 1]} : vector<8x96xf32> to vector<8x32xf32>
    %159 = arith.mulf %149, %130 : vector<8x32xf32>
    %160 = arith.truncf %159 : vector<8x32xf32> to vector<8x32xbf16>
    %cst_54 = arith.constant dense<0.000000e+00> : vector<8x32xf32>
    %161 = tpu.matmul %160, %13, %cst_54 {dimension_numbers = #tpu.dot_dimension_numbers<[1], [0], [0], [1], [0, 0, 1, 1], [], []>} : vector<8x32xbf16>, vector<32x32xbf16>, vector<8x32xf32> -> vector<8x32xf32>
    %162 = arith.addf %158, %161 : vector<8x32xf32>
    %163 = math.tanh %162 : vector<8x32xf32>
    %cst_55 = arith.constant 1.000000e+00 : f32
    %164 = vector.broadcast %cst_55 : f32 to vector<8x32xf32>
    %165 = arith.subf %164, %157 : vector<8x32xf32>
    %166 = arith.subf %163, %130 : vector<8x32xf32>
    %167 = arith.mulf %165, %166 : vector<8x32xf32>
    %cst_56 = arith.constant 1.500000e-01 : f32
    %168 = vector.broadcast %cst_56 : f32 to vector<8x32xf32>
    %169 = arith.mulf %168, %167 : vector<8x32xf32>
    %170 = arith.addf %130, %169 : vector<8x32xf32>
    %c24 = arith.constant 24 : index
    %c0_57 = arith.constant 0 : index
    %171 = vector.load %arg12[%c24, %c0_57] : memref<48x32xf32, #tpu.memory_space<vmem>>, vector<8x32xf32>
    tpu.vector_store %arg12[%c24, %c0_57], %170 {strides = array<i32>} : memref<48x32xf32, #tpu.memory_space<vmem>>, vector<8x32xf32>,
    %172 = arith.truncf %170 : vector<8x32xf32> to vector<8x32xbf16>
    %cst_58 = arith.constant dense<0.000000e+00> : vector<8x80xf32>
    %173 = tpu.matmul %172, %7, %cst_58 {dimension_numbers = #tpu.dot_dimension_numbers<[1], [0], [0], [1], [0, 0, 1, 1], [], []>} : vector<8x32xbf16>, vector<32x80xbf16>, vector<8x80xf32> -> vector<8x80xf32>
    %174 = arith.addf %173, %48 : vector<8x80xf32>
    %175 = vector.extract_strided_slice %174 {offsets = [0, 0], sizes = [8, 16], strides = [1, 1]} : vector<8x80xf32> to vector<8x16xf32>
    %cst_59 = arith.constant 0.000000e+00 : f32
    %176 = vector.broadcast %cst_59 : f32 to vector<8x16xf32>
    %177 = arith.maximumf %175, %176 : vector<8x16xf32>
    %178 = vector.extract_strided_slice %174 {offsets = [0, 16], sizes = [8, 64], strides = [1, 1]} : vector<8x80xf32> to vector<8x64xf32>
    %179 = arith.truncf %177 : vector<8x16xf32> to vector<8x16xbf16>
    %cst_60 = arith.constant dense<0.000000e+00> : vector<8x96xf32>
    %180 = tpu.matmul %179, %10, %cst_60 {dimension_numbers = #tpu.dot_dimension_numbers<[1], [0], [0], [1], [0, 0, 1, 1], [], []>} : vector<8x16xbf16>, vector<16x96xbf16>, vector<8x96xf32> -> vector<8x96xf32>
    %181 = arith.addf %180, %50 : vector<8x96xf32>
    %182 = vector.extract_strided_slice %181 {offsets = [0, 0], sizes = [8, 32], strides = [1, 1]} : vector<8x96xf32> to vector<8x32xf32>
    %183 = vector.extract_strided_slice %178 {offsets = [0, 0], sizes = [8, 32], strides = [1, 1]} : vector<8x64xf32> to vector<8x32xf32>
    %184 = arith.addf %182, %183 : vector<8x32xf32>
    %185 = arith.negf %184 : vector<8x32xf32>
    %186 = math.exp %185 : vector<8x32xf32>
    %cst_61 = arith.constant 1.000000e+00 : f32
    %187 = vector.broadcast %cst_61 : f32 to vector<8x32xf32>
    %188 = arith.addf %187, %186 : vector<8x32xf32>
    %189 = arith.divf %187, %188 : vector<8x32xf32>
    %190 = vector.extract_strided_slice %181 {offsets = [0, 32], sizes = [8, 32], strides = [1, 1]} : vector<8x96xf32> to vector<8x32xf32>
    %191 = vector.extract_strided_slice %178 {offsets = [0, 32], sizes = [8, 32], strides = [1, 1]} : vector<8x64xf32> to vector<8x32xf32>
    %192 = arith.addf %190, %191 : vector<8x32xf32>
    %193 = arith.negf %192 : vector<8x32xf32>
    %194 = math.exp %193 : vector<8x32xf32>
    %cst_62 = arith.constant 1.000000e+00 : f32
    %195 = vector.broadcast %cst_62 : f32 to vector<8x32xf32>
    %196 = arith.addf %195, %194 : vector<8x32xf32>
    %197 = arith.divf %195, %196 : vector<8x32xf32>
    %198 = vector.extract_strided_slice %181 {offsets = [0, 64], sizes = [8, 32], strides = [1, 1]} : vector<8x96xf32> to vector<8x32xf32>
    %199 = arith.mulf %189, %170 : vector<8x32xf32>
    %200 = arith.truncf %199 : vector<8x32xf32> to vector<8x32xbf16>
    %cst_63 = arith.constant dense<0.000000e+00> : vector<8x32xf32>
    %201 = tpu.matmul %200, %13, %cst_63 {dimension_numbers = #tpu.dot_dimension_numbers<[1], [0], [0], [1], [0, 0, 1, 1], [], []>} : vector<8x32xbf16>, vector<32x32xbf16>, vector<8x32xf32> -> vector<8x32xf32>
    %202 = arith.addf %198, %201 : vector<8x32xf32>
    %203 = math.tanh %202 : vector<8x32xf32>
    %cst_64 = arith.constant 1.000000e+00 : f32
    %204 = vector.broadcast %cst_64 : f32 to vector<8x32xf32>
    %205 = arith.subf %204, %197 : vector<8x32xf32>
    %206 = arith.subf %203, %170 : vector<8x32xf32>
    %207 = arith.mulf %205, %206 : vector<8x32xf32>
    %cst_65 = arith.constant 0.200000018 : f32
    %208 = vector.broadcast %cst_65 : f32 to vector<8x32xf32>
    %209 = arith.mulf %208, %207 : vector<8x32xf32>
    %210 = arith.addf %170, %209 : vector<8x32xf32>
    %c32_66 = arith.constant 32 : index
    %c0_67 = arith.constant 0 : index
    %211 = vector.load %arg12[%c32_66, %c0_67] : memref<48x32xf32, #tpu.memory_space<vmem>>, vector<8x32xf32>
    tpu.vector_store %arg12[%c32_66, %c0_67], %210 {strides = array<i32>} : memref<48x32xf32, #tpu.memory_space<vmem>>, vector<8x32xf32>,
    %212 = arith.truncf %210 : vector<8x32xf32> to vector<8x32xbf16>
    %cst_68 = arith.constant dense<0.000000e+00> : vector<8x80xf32>
    %213 = tpu.matmul %212, %7, %cst_68 {dimension_numbers = #tpu.dot_dimension_numbers<[1], [0], [0], [1], [0, 0, 1, 1], [], []>} : vector<8x32xbf16>, vector<32x80xbf16>, vector<8x80xf32> -> vector<8x80xf32>
    %214 = arith.addf %213, %48 : vector<8x80xf32>
    %215 = vector.extract_strided_slice %214 {offsets = [0, 0], sizes = [8, 16], strides = [1, 1]} : vector<8x80xf32> to vector<8x16xf32>
    %cst_69 = arith.constant 0.000000e+00 : f32
    %216 = vector.broadcast %cst_69 : f32 to vector<8x16xf32>
    %217 = arith.maximumf %215, %216 : vector<8x16xf32>
    %218 = vector.extract_strided_slice %214 {offsets = [0, 16], sizes = [8, 64], strides = [1, 1]} : vector<8x80xf32> to vector<8x64xf32>
    %219 = arith.truncf %217 : vector<8x16xf32> to vector<8x16xbf16>
    %cst_70 = arith.constant dense<0.000000e+00> : vector<8x96xf32>
    %220 = tpu.matmul %219, %10, %cst_70 {dimension_numbers = #tpu.dot_dimension_numbers<[1], [0], [0], [1], [0, 0, 1, 1], [], []>} : vector<8x16xbf16>, vector<16x96xbf16>, vector<8x96xf32> -> vector<8x96xf32>
    %221 = arith.addf %220, %50 : vector<8x96xf32>
    %222 = vector.extract_strided_slice %221 {offsets = [0, 0], sizes = [8, 32], strides = [1, 1]} : vector<8x96xf32> to vector<8x32xf32>
    %223 = vector.extract_strided_slice %218 {offsets = [0, 0], sizes = [8, 32], strides = [1, 1]} : vector<8x64xf32> to vector<8x32xf32>
    %224 = arith.addf %222, %223 : vector<8x32xf32>
    %225 = arith.negf %224 : vector<8x32xf32>
    %226 = math.exp %225 : vector<8x32xf32>
    %cst_71 = arith.constant 1.000000e+00 : f32
    %227 = vector.broadcast %cst_71 : f32 to vector<8x32xf32>
    %228 = arith.addf %227, %226 : vector<8x32xf32>
    %229 = arith.divf %227, %228 : vector<8x32xf32>
    %230 = vector.extract_strided_slice %221 {offsets = [0, 32], sizes = [8, 32], strides = [1, 1]} : vector<8x96xf32> to vector<8x32xf32>
    %231 = vector.extract_strided_slice %218 {offsets = [0, 32], sizes = [8, 32], strides = [1, 1]} : vector<8x64xf32> to vector<8x32xf32>
    %232 = arith.addf %230, %231 : vector<8x32xf32>
    %233 = arith.negf %232 : vector<8x32xf32>
    %234 = math.exp %233 : vector<8x32xf32>
    %cst_72 = arith.constant 1.000000e+00 : f32
    %235 = vector.broadcast %cst_72 : f32 to vector<8x32xf32>
    %236 = arith.addf %235, %234 : vector<8x32xf32>
    %237 = arith.divf %235, %236 : vector<8x32xf32>
    %238 = vector.extract_strided_slice %221 {offsets = [0, 64], sizes = [8, 32], strides = [1, 1]} : vector<8x96xf32> to vector<8x32xf32>
    %239 = arith.mulf %229, %210 : vector<8x32xf32>
    %240 = arith.truncf %239 : vector<8x32xf32> to vector<8x32xbf16>
    %cst_73 = arith.constant dense<0.000000e+00> : vector<8x32xf32>
    %241 = tpu.matmul %240, %13, %cst_73 {dimension_numbers = #tpu.dot_dimension_numbers<[1], [0], [0], [1], [0, 0, 1, 1], [], []>} : vector<8x32xbf16>, vector<32x32xbf16>, vector<8x32xf32> -> vector<8x32xf32>
    %242 = arith.addf %238, %241 : vector<8x32xf32>
    %243 = math.tanh %242 : vector<8x32xf32>
    %cst_74 = arith.constant 1.000000e+00 : f32
    %244 = vector.broadcast %cst_74 : f32 to vector<8x32xf32>
    %245 = arith.subf %244, %237 : vector<8x32xf32>
    %246 = arith.subf %243, %210 : vector<8x32xf32>
    %247 = arith.mulf %245, %246 : vector<8x32xf32>
    %cst_75 = arith.constant 2.500000e-01 : f32
    %248 = vector.broadcast %cst_75 : f32 to vector<8x32xf32>
    %249 = arith.mulf %248, %247 : vector<8x32xf32>
    %250 = arith.addf %210, %249 : vector<8x32xf32>
    %c40_76 = arith.constant 40 : index
    %c0_77 = arith.constant 0 : index
    %251 = vector.load %arg12[%c40_76, %c0_77] : memref<48x32xf32, #tpu.memory_space<vmem>>, vector<8x32xf32>
    tpu.vector_store %arg12[%c40_76, %c0_77], %250 {strides = array<i32>} : memref<48x32xf32, #tpu.memory_space<vmem>>, vector<8x32xf32>,
    %c0_78 = arith.constant 0 : index
    %c0_79 = arith.constant 0 : index
    %252 = vector.load %arg6[%c0_78, %c0_79] : memref<16x48xf32, #tpu.memory_space<vmem>>, vector<16x48xf32>
    %c0_80 = arith.constant 0 : index
    %c0_81 = arith.constant 0 : index
    %253 = vector.load %arg12[%c0_80, %c0_81] : memref<48x32xf32, #tpu.memory_space<vmem>>, vector<48x32xf32>
    %cst_82 = arith.constant dense<0.000000e+00> : vector<16x32xf32>
    %254 = tpu.matmul %252, %253, %cst_82 {dimension_numbers = #tpu.dot_dimension_numbers<[1], [0], [0], [1], [0, 0, 1, 1], [], []>} : vector<16x48xf32>, vector<48x32xf32>, vector<16x32xf32> -> vector<16x32xf32>
    %c0_83 = arith.constant 0 : index
    %c0_84 = arith.constant 0 : index
    %255 = vector.load %arg1[%c0_83, %c0_84] : memref<16x8xf32, #tpu.memory_space<vmem>>, vector<16x8xf32>
    %c0_85 = arith.constant 0 : index
    %c0_86 = arith.constant 0 : index
    %256 = vector.load %arg2[%c0_85, %c0_86] : memref<16x8xf32, #tpu.memory_space<vmem>>, vector<16x8xf32>
    %257 = arith.truncf %254 : vector<16x32xf32> to vector<16x32xbf16>
    %cst_87 = arith.constant dense<0.000000e+00> : vector<16x16xf32>
    %258 = tpu.matmul %257, %15, %cst_87 {dimension_numbers = #tpu.dot_dimension_numbers<[1], [0], [0], [1], [0, 0, 1, 1], [], []>} : vector<16x32xbf16>, vector<32x16xbf16>, vector<16x16xf32> -> vector<16x16xf32>
    %259 = vector.broadcast %16 : vector<1x16xf32> to vector<16x16xf32>
    %260 = arith.addf %258, %259 : vector<16x16xf32>
    %cst_88 = arith.constant 0.000000e+00 : f32
    %261 = vector.broadcast %cst_88 : f32 to vector<16x16xf32>
    %262 = arith.maximumf %260, %261 : vector<16x16xf32>
    %263 = arith.truncf %262 : vector<16x16xf32> to vector<16x16xbf16>
    %cst_89 = arith.constant dense<0.000000e+00> : vector<16x16xf32>
    %264 = tpu.matmul %263, %18, %cst_89 {dimension_numbers = #tpu.dot_dimension_numbers<[1], [0], [0], [1], [0, 0, 1, 1], [], []>} : vector<16x16xbf16>, vector<16x16xbf16>, vector<16x16xf32> -> vector<16x16xf32>
    %265 = vector.broadcast %19 : vector<1x16xf32> to vector<16x16xf32>
    %266 = arith.addf %264, %265 : vector<16x16xf32>
    %267 = vector.extract_strided_slice %266 {offsets = [0, 0], sizes = [16, 8], strides = [1, 1]} : vector<16x16xf32> to vector<16x8xf32>
    %268 = vector.extract_strided_slice %266 {offsets = [0, 8], sizes = [16, 8], strides = [1, 1]} : vector<16x16xf32> to vector<16x8xf32>
    %cst_90 = arith.constant -5.000000e-01 : f32
    %269 = vector.broadcast %cst_90 : f32 to vector<16x8xf32>
    %270 = arith.mulf %269, %268 : vector<16x8xf32>
    %271 = math.exp %270 : vector<16x8xf32>
    %272 = arith.subf %255, %267 : vector<16x8xf32>
    %273 = arith.mulf %272, %271 : vector<16x8xf32>
    %274 = arith.mulf %273, %273 : vector<16x8xf32>
    %275 = arith.addf %274, %268 : vector<16x8xf32>
    %cst_91 = arith.constant 1.83787704 : f32
    %276 = vector.broadcast %cst_91 : f32 to vector<16x8xf32>
    %277 = arith.addf %275, %276 : vector<16x8xf32>
    %278 = arith.mulf %277, %256 : vector<16x8xf32>
    %cst_92 = arith.constant 5.000000e-01 : f32
    %279 = vector.broadcast %cst_92 : f32 to vector<16x8xf32>
    %280 = arith.mulf %279, %278 : vector<16x8xf32>
    %281 = vector.shape_cast %280 : vector<16x8xf32> to vector<1x16x8xf32>
    %cst_93 = arith.constant dense<0.000000e+00> : vector<1xf32>
    %282 = vector.multi_reduction <add>, %281, %cst_93 [1, 2] : vector<1x16x8xf32> to vector<1xf32>
    %283 = vector.shape_cast %282 : vector<1xf32> to vector<1x1x1xf32>
    %284 = vector.extract %283[0, 0, 0] : f32 from vector<1x1x1xf32>
    %285 = tpu.concatenate %255, %267, %268, %273 in 1 : vector<16x8xf32>, vector<16x8xf32>, vector<16x8xf32>, vector<16x8xf32> -> vector<16x32xf32>
    %286 = arith.truncf %285 : vector<16x32xf32> to vector<16x32xbf16>
    %cst_94 = arith.constant dense<0.000000e+00> : vector<16x32xf32>
    %287 = tpu.matmul %286, %21, %cst_94 {dimension_numbers = #tpu.dot_dimension_numbers<[1], [0], [0], [1], [0, 0, 1, 1], [], []>} : vector<16x32xbf16>, vector<32x32xbf16>, vector<16x32xf32> -> vector<16x32xf32>
    %288 = vector.broadcast %22 : vector<1x32xf32> to vector<16x32xf32>
    %289 = arith.addf %287, %288 : vector<16x32xf32>
    %cst_95 = arith.constant 0.000000e+00 : f32
    %290 = vector.broadcast %cst_95 : f32 to vector<16x32xf32>
    %291 = arith.maximumf %289, %290 : vector<16x32xf32>
    %c0_96 = arith.constant 0 : index
    %c0_97 = arith.constant 0 : index
    %292 = vector.load %arg3[%c0_96, %c0_97] : memref<16x32xf32, #tpu.memory_space<vmem>>, vector<16x32xf32>
    %293 = arith.mulf %291, %292 : vector<16x32xf32>
    %294 = arith.truncf %293 : vector<16x32xf32> to vector<16x32xbf16>
    %cst_98 = arith.constant dense<0.000000e+00> : vector<16x96xf32>
    %295 = tpu.matmul %294, %24, %cst_98 {dimension_numbers = #tpu.dot_dimension_numbers<[1], [0], [0], [1], [0, 0, 1, 1], [], []>} : vector<16x32xbf16>, vector<32x96xbf16>, vector<16x96xf32> -> vector<16x96xf32>
    %296 = vector.broadcast %25 : vector<1x96xf32> to vector<16x96xf32>
    %297 = arith.addf %295, %296 : vector<16x96xf32>
    %298 = arith.truncf %254 : vector<16x32xf32> to vector<16x32xbf16>
    %cst_99 = arith.constant dense<0.000000e+00> : vector<16x96xf32>
    %299 = tpu.matmul %298, %27, %cst_99 {dimension_numbers = #tpu.dot_dimension_numbers<[1], [0], [0], [1], [0, 0, 1, 1], [], []>} : vector<16x32xbf16>, vector<32x96xbf16>, vector<16x96xf32> -> vector<16x96xf32>
    %300 = vector.broadcast %28 : vector<1x96xf32> to vector<16x96xf32>
    %301 = arith.addf %299, %300 : vector<16x96xf32>
    %302 = vector.extract_strided_slice %297 {offsets = [0, 0], sizes = [16, 32], strides = [1, 1]} : vector<16x96xf32> to vector<16x32xf32>
    %303 = vector.extract_strided_slice %301 {offsets = [0, 0], sizes = [16, 32], strides = [1, 1]} : vector<16x96xf32> to vector<16x32xf32>
    %304 = arith.addf %302, %303 : vector<16x32xf32>
    %305 = arith.negf %304 : vector<16x32xf32>
    %306 = math.exp %305 : vector<16x32xf32>
    %cst_100 = arith.constant 1.000000e+00 : f32
    %307 = vector.broadcast %cst_100 : f32 to vector<16x32xf32>
    %308 = arith.addf %307, %306 : vector<16x32xf32>
    %309 = arith.divf %307, %308 : vector<16x32xf32>
    %310 = vector.extract_strided_slice %297 {offsets = [0, 32], sizes = [16, 32], strides = [1, 1]} : vector<16x96xf32> to vector<16x32xf32>
    %311 = vector.extract_strided_slice %301 {offsets = [0, 32], sizes = [16, 32], strides = [1, 1]} : vector<16x96xf32> to vector<16x32xf32>
    %312 = arith.addf %310, %311 : vector<16x32xf32>
    %313 = arith.negf %312 : vector<16x32xf32>
    %314 = math.exp %313 : vector<16x32xf32>
    %cst_101 = arith.constant 1.000000e+00 : f32
    %315 = vector.broadcast %cst_101 : f32 to vector<16x32xf32>
    %316 = arith.addf %315, %314 : vector<16x32xf32>
    %317 = arith.divf %315, %316 : vector<16x32xf32>
    %318 = vector.extract_strided_slice %297 {offsets = [0, 64], sizes = [16, 32], strides = [1, 1]} : vector<16x96xf32> to vector<16x32xf32>
    %319 = vector.extract_strided_slice %301 {offsets = [0, 64], sizes = [16, 32], strides = [1, 1]} : vector<16x96xf32> to vector<16x32xf32>
    %320 = arith.mulf %309, %319 : vector<16x32xf32>
    %321 = arith.addf %318, %320 : vector<16x32xf32>
    %322 = math.tanh %321 : vector<16x32xf32>
    %cst_102 = arith.constant 1.000000e+00 : f32
    %323 = vector.broadcast %cst_102 : f32 to vector<16x32xf32>
    %324 = arith.subf %323, %317 : vector<16x32xf32>
    %325 = arith.mulf %324, %322 : vector<16x32xf32>
    %326 = arith.mulf %317, %254 : vector<16x32xf32>
    %327 = arith.addf %325, %326 : vector<16x32xf32>
    %328 = arith.truncf %327 : vector<16x32xf32> to vector<16x32xbf16>
    %cst_103 = arith.constant dense<0.000000e+00> : vector<16x16xf32>
    %329 = tpu.matmul %328, %15, %cst_103 {dimension_numbers = #tpu.dot_dimension_numbers<[1], [0], [0], [1], [0, 0, 1, 1], [], []>} : vector<16x32xbf16>, vector<32x16xbf16>, vector<16x16xf32> -> vector<16x16xf32>
    %330 = vector.broadcast %16 : vector<1x16xf32> to vector<16x16xf32>
    %331 = arith.addf %329, %330 : vector<16x16xf32>
    %cst_104 = arith.constant 0.000000e+00 : f32
    %332 = vector.broadcast %cst_104 : f32 to vector<16x16xf32>
    %333 = arith.maximumf %331, %332 : vector<16x16xf32>
    %334 = arith.truncf %333 : vector<16x16xf32> to vector<16x16xbf16>
    %cst_105 = arith.constant dense<0.000000e+00> : vector<16x16xf32>
    %335 = tpu.matmul %334, %18, %cst_105 {dimension_numbers = #tpu.dot_dimension_numbers<[1], [0], [0], [1], [0, 0, 1, 1], [], []>} : vector<16x16xbf16>, vector<16x16xbf16>, vector<16x16xf32> -> vector<16x16xf32>
    %336 = vector.broadcast %19 : vector<1x16xf32> to vector<16x16xf32>
    %337 = arith.addf %335, %336 : vector<16x16xf32>
    %338 = vector.extract_strided_slice %337 {offsets = [0, 0], sizes = [16, 8], strides = [1, 1]} : vector<16x16xf32> to vector<16x8xf32>
    %339 = vector.extract_strided_slice %337 {offsets = [0, 8], sizes = [16, 8], strides = [1, 1]} : vector<16x16xf32> to vector<16x8xf32>
    %cst_106 = arith.constant 5.000000e-01 : f32
    %340 = vector.broadcast %cst_106 : f32 to vector<16x8xf32>
    %341 = arith.mulf %340, %339 : vector<16x8xf32>
    %cst_107 = arith.constant -4.60517025 : f32
    %342 = vector.broadcast %cst_107 : f32 to vector<16x8xf32>
    %343 = arith.subf %342, %341 : vector<16x8xf32>
    %344 = math.exp %339 : vector<16x8xf32>
    %345 = arith.subf %338, %255 : vector<16x8xf32>
    %346 = arith.mulf %345, %345 : vector<16x8xf32>
    %347 = arith.addf %344, %346 : vector<16x8xf32>
    %cst_108 = arith.constant 5.000000e+03 : f32
    %348 = vector.broadcast %cst_108 : f32 to vector<16x8xf32>
    %349 = arith.mulf %347, %348 : vector<16x8xf32>
    %350 = arith.addf %343, %349 : vector<16x8xf32>
    %cst_109 = arith.constant 5.000000e-01 : f32
    %351 = vector.broadcast %cst_109 : f32 to vector<16x8xf32>
    %352 = arith.subf %350, %351 : vector<16x8xf32>
    %353 = arith.mulf %352, %256 : vector<16x8xf32>
    %354 = vector.shape_cast %353 : vector<16x8xf32> to vector<1x16x8xf32>
    %cst_110 = arith.constant dense<0.000000e+00> : vector<1xf32>
    %355 = vector.multi_reduction <add>, %354, %cst_110 [1, 2] : vector<1x16x8xf32> to vector<1xf32>
    %356 = vector.shape_cast %355 : vector<1xf32> to vector<1x1x1xf32>
    %357 = vector.extract %356[0, 0, 0] : f32 from vector<1x1x1xf32>
    %c0_111 = arith.constant 0 : index
    %c0_112 = arith.constant 0 : index
    %358 = vector.load %arg7[%c0_111, %c0_112] : memref<8x16xf32, #tpu.memory_space<vmem>>, vector<8x16xf32>
    %359 = arith.subf %327, %254 : vector<16x32xf32>
    %cst_113 = arith.constant dense<0.000000e+00> : vector<8x32xf32>
    %360 = tpu.matmul %358, %359, %cst_113 {dimension_numbers = #tpu.dot_dimension_numbers<[1], [0], [0], [1], [0, 0, 1, 1], [], []>} : vector<8x16xf32>, vector<16x32xf32>, vector<8x32xf32> -> vector<8x32xf32>
    %cst_114 = arith.constant 2.000000e+00 : f32
    %361 = vector.broadcast %cst_114 : f32 to vector<8x32xf32>
    %362 = arith.mulf %361, %360 : vector<8x32xf32>
    %363 = arith.addf %250, %362 : vector<8x32xf32>
    %c0_115 = arith.constant 0 : index
    %c0_116 = arith.constant 0 : index
    %364 = vector.load %arg9[%c0_115, %c0_116] : memref<8x32xf32, #tpu.memory_space<vmem>>, vector<8x32xf32>
    tpu.vector_store %arg9[%c0_115, %c0_116], %363 {strides = array<i32>} : memref<8x32xf32, #tpu.memory_space<vmem>>, vector<8x32xf32>,
    %365 = tpu.concatenate %327, %363 in 0 : vector<16x32xf32>, vector<8x32xf32> -> vector<24x32xf32>
    %366 = arith.truncf %365 : vector<24x32xf32> to vector<24x32xbf16>
    %cst_117 = arith.constant dense<0.000000e+00> : vector<24x16xf32>
    %367 = tpu.matmul %366, %30, %cst_117 {dimension_numbers = #tpu.dot_dimension_numbers<[1], [0], [0], [1], [0, 0, 1, 1], [], []>} : vector<24x32xbf16>, vector<32x16xbf16>, vector<24x16xf32> -> vector<24x16xf32>
    %368 = vector.broadcast %31 : vector<1x16xf32> to vector<24x16xf32>
    %369 = arith.addf %367, %368 : vector<24x16xf32>
    %cst_118 = arith.constant 0.000000e+00 : f32
    %370 = vector.broadcast %cst_118 : f32 to vector<24x16xf32>
    %371 = arith.maximumf %369, %370 : vector<24x16xf32>
    %372 = arith.truncf %371 : vector<24x16xf32> to vector<24x16xbf16>
    %cst_119 = arith.constant dense<0.000000e+00> : vector<24x2xf32>
    %373 = tpu.matmul %372, %33, %cst_119 {dimension_numbers = #tpu.dot_dimension_numbers<[1], [0], [0], [1], [0, 0, 1, 1], [], []>} : vector<24x16xbf16>, vector<16x2xbf16>, vector<24x2xf32> -> vector<24x2xf32>
    %374 = vector.broadcast %34 : vector<1x2xf32> to vector<24x2xf32>
    %375 = arith.addf %373, %374 : vector<24x2xf32>
    %376 = vector.extract_strided_slice %375 {offsets = [0, 0], sizes = [16, 2], strides = [1, 1]} : vector<24x2xf32> to vector<16x2xf32>
    %377 = vector.extract_strided_slice %375 {offsets = [16, 0], sizes = [8, 2], strides = [1, 1]} : vector<24x2xf32> to vector<8x2xf32>
    %c0_120 = arith.constant 0 : index
    %c0_121 = arith.constant 0 : index
    %378 = vector.load %arg10[%c0_120, %c0_121] : memref<8x2xf32, #tpu.memory_space<vmem>>, vector<8x2xf32>
    tpu.vector_store %arg10[%c0_120, %c0_121], %377 {strides = array<i32>} : memref<8x2xf32, #tpu.memory_space<vmem>>, vector<8x2xf32>,
    %c0_122 = arith.constant 0 : index
    %c0_123 = arith.constant 0 : index
    %379 = vector.load %arg5[%c0_122, %c0_123] : memref<16x2xf32, #tpu.memory_space<vmem>>, vector<16x2xf32>
    %cst_124 = arith.constant 0.000000e+00 : f32
    %380 = vector.broadcast %cst_124 : f32 to vector<16x2xf32>
    %381 = arith.maximumf %376, %380 : vector<16x2xf32>
    %382 = arith.mulf %376, %379 : vector<16x2xf32>
    %383 = arith.subf %381, %382 : vector<16x2xf32>
    %384 = math.absf %376 : vector<16x2xf32>
    %cst_125 = arith.constant 0.000000e+00 : f32
    %385 = vector.broadcast %cst_125 : f32 to vector<16x2xf32>
    %386 = arith.subf %385, %384 : vector<16x2xf32>
    %387 = math.exp %386 : vector<16x2xf32>
    %388 = math.log1p %387 : vector<16x2xf32>
    %389 = arith.addf %383, %388 : vector<16x2xf32>
    %390 = vector.shape_cast %389 : vector<16x2xf32> to vector<1x16x2xf32>
    %cst_126 = arith.constant dense<0.000000e+00> : vector<1xf32>
    %391 = vector.multi_reduction <add>, %390, %cst_126 [1, 2] : vector<1x16x2xf32> to vector<1xf32>
    %392 = vector.shape_cast %391 : vector<1xf32> to vector<1x1x1xf32>
    %393 = vector.extract %392[0, 0, 0] : f32 from vector<1x1x1xf32>
    %c0_127 = arith.constant 0 : index
    %c0_128 = arith.constant 0 : index
    %394 = vector.load %arg4[%c0_127, %c0_128] : memref<8x2xf32, #tpu.memory_space<vmem>>, vector<8x2xf32>
    %cst_129 = arith.constant 0.000000e+00 : f32
    %395 = vector.broadcast %cst_129 : f32 to vector<8x2xf32>
    %396 = arith.maximumf %377, %395 : vector<8x2xf32>
    %397 = arith.mulf %377, %394 : vector<8x2xf32>
    %398 = arith.subf %396, %397 : vector<8x2xf32>
    %399 = math.absf %377 : vector<8x2xf32>
    %cst_130 = arith.constant 0.000000e+00 : f32
    %400 = vector.broadcast %cst_130 : f32 to vector<8x2xf32>
    %401 = arith.subf %400, %399 : vector<8x2xf32>
    %402 = math.exp %401 : vector<8x2xf32>
    %403 = math.log1p %402 : vector<8x2xf32>
    %404 = arith.addf %398, %403 : vector<8x2xf32>
    %405 = vector.shape_cast %404 : vector<8x2xf32> to vector<1x8x2xf32>
    %cst_131 = arith.constant dense<0.000000e+00> : vector<1xf32>
    %406 = vector.multi_reduction <add>, %405, %cst_131 [1, 2] : vector<1x8x2xf32> to vector<1xf32>
    %407 = vector.shape_cast %406 : vector<1xf32> to vector<1x1x1xf32>
    %408 = vector.extract %407[0, 0, 0] : f32 from vector<1x1x1xf32>
    %409 = arith.addf %393, %408 : f32
    %cst_132 = arith.constant 1.000000e+00 : f32
    %410 = arith.mulf %cst_132, %357 : f32
    %411 = arith.addf %284, %410 : f32
    %cst_133 = arith.constant 1.000000e+00 : f32
    %412 = arith.mulf %cst_133, %409 : f32
    %413 = arith.addf %411, %412 : f32
    %c0_134 = arith.constant 0 : index
    %414 = memref.load %arg11[%c0_134] : memref<4xf32, #tpu.memory_space<smem>>
    memref.store %284, %arg11[%c0_134] : memref<4xf32, #tpu.memory_space<smem>>
    %c1 = arith.constant 1 : index
    %415 = memref.load %arg11[%c1] : memref<4xf32, #tpu.memory_space<smem>>
    memref.store %357, %arg11[%c1] : memref<4xf32, #tpu.memory_space<smem>>
    %c2 = arith.constant 2 : index
    %416 = memref.load %arg11[%c2] : memref<4xf32, #tpu.memory_space<smem>>
    memref.store %409, %arg11[%c2] : memref<4xf32, #tpu.memory_space<smem>>
    %c3 = arith.constant 3 : index
    %417 = memref.load %arg11[%c3] : memref<4xf32, #tpu.memory_space<smem>>
    memref.store %413, %arg11[%c3] : memref<4xf32, #tpu.memory_space<smem>>
    return
  }
}

</mosaic_0001>

<llo_original>
// kernel: fwd.1
$region0: #{fwd.1}
  #allocation0 [shape = 'u32[]', space=smem, size = 0x4, offset = 0x4, fixed_abs, tag = 'smem constant byte address 0x4 - core index']
  #allocation1 [shape = 'u32[144,128]{1,0:T(1,128)}', space=vmem, size = 0x12000, scoped, tag = 'internal scratch']
  #allocation2 [shape = 'f32[48,32]{1,0:T(8,128)}', space=vmem, size = 0x6000, scoped, tag = 'scratch operand']
  %s0 = inlined_call_operand.vmem [shape: f32[8,8], index: 0, kind: input, shape index: {}]
  %s1 = inlined_call_operand.vmem [shape: f32[16,8], index: 1, kind: input, shape index: {}]
  %s2 = inlined_call_operand.vmem [shape: f32[16,8], index: 2, kind: input, shape index: {}]
  %s3 = inlined_call_operand.vmem [shape: f32[16,32], index: 3, kind: input, shape index: {}]
  %s4 = inlined_call_operand.vmem [shape: f32[8,2], index: 4, kind: input, shape index: {}]
  %s5 = inlined_call_operand.vmem [shape: f32[16,2], index: 5, kind: input, shape index: {}]
  %s6 = inlined_call_operand.vmem [shape: f32[16,48], index: 6, kind: input, shape index: {}]
  %s7 = inlined_call_operand.vmem [shape: f32[8,16], index: 7, kind: input, shape index: {}]
  %s8 = inlined_call_operand.hbm [shape: f32[384,128], index: 8, kind: input, shape index: {}]
  %s9 = inlined_call_operand.hbm [shape: f32[8,32], index: 9, kind: output, shape index: {0}]
  %s10 = inlined_call_operand.vmem [shape: f32[8,2], index: 10, kind: output, shape index: {1}]
  %s11 = inlined_call_operand.hbm [shape: f32[4], index: 11, kind: output, shape index: {2}]
  %12 = xla_tuple %s9, %s10, %s11
  %s13 = sld [smem:[#allocation0]]
  $region66: #{fwd.1} parent=0
    _
  %s15 = ssub.s32 1, %s13
  %s16 = scalar_select 0, %s15, %s13
  $region1: #{fwd.1} parent=0
    #allocation3 [shape = 'u8[196608]{0}', space=vmem, size = 0x30000, scoped, tag = 'input window, operand 8, single buffered']
    #allocation4 [shape = 's32[1]{0}', space=sflag, size = 0x4, scoped, tag = 'scoped memory for fwd.1']
    #allocation5 [shape = 's32[1]{0}', space=sflag, size = 0x4, scoped, tag = 'scoped memory for fwd.1']
    #allocation6 [shape = 's32[1]{0}', space=sflag, size = 0x4, scoped, tag = 'scoped memory for fwd.1']
    #allocation7 [shape = 'u8[4096]{0}', space=vmem, size = 0x1000, scoped, tag = 'output window, operand 0, single buffered']
    #allocation8 [shape = 'u8[512]{0}', space=smem, size = 0x200, scoped, tag = 'output window, operand 2, single buffered']
    %17 = vsyncpa [#allocation4], 0
    %18 = vsyncpa [#allocation5], 0
    %19 = vsyncpa [#allocation6], 0
    // Predicated region
    $region2: #{fwd.1} parent=1 // pred_check
      _
    $region3: #{fwd.1} parent=1 // pred_check_branch
      %21 = sbr.rel (0) target = $region5
    $region4: #{fwd.1} parent=1 // pred_region
      _
    $region5: #{fwd.1} parent=1 // pred_fallthru
      _
    // Predicated region
    $region6: #{fwd.1} parent=1 // pred_check
      _
    $region7: #{fwd.1} parent=1 // pred_check_branch
      %23 = sbr.rel (0) target = $region9
    $region8: #{fwd.1} parent=1 // pred_region
      _
    $region9: #{fwd.1} parent=1 // pred_fallthru
      _
    // Predicated region
    $region10: #{fwd.1} parent=1 // pred_check
      _
    $region11: #{fwd.1} parent=1 // pred_check_branch
      %25 = sbr.rel (0) target = $region13
    $region12: #{fwd.1} parent=1 // pred_region
      _
    $region13: #{fwd.1} parent=1 // pred_fallthru
      _
    // Predicated region
    $region14: #{fwd.1} parent=1 // pred_check
      _
    $region15: #{fwd.1} parent=1 // pred_check_branch
      %27 = sbr.rel (0) target = $region17
    $region16: #{fwd.1} parent=1 // pred_region
      _
    $region17: #{fwd.1} parent=1 // pred_fallthru
      _
    // Predicated region
    $region18: #{fwd.1} parent=1 // pred_check
      _
    $region19: #{fwd.1} parent=1 // pred_check_branch
      %29 = sbr.rel (0) target = $region21
    $region20: #{fwd.1} parent=1 // pred_region
      _
    $region21: #{fwd.1} parent=1 // pred_fallthru
      _
    // Predicated region
    $region22: #{fwd.1} parent=1 // pred_check
      _
    $region23: #{fwd.1} parent=1 // pred_check_branch
      %31 = sbr.rel (0) target = $region25
    $region24: #{fwd.1} parent=1 // pred_region
      _
    $region25: #{fwd.1} parent=1 // pred_fallthru
      _
    // Predicated region
    $region26: #{fwd.1} parent=1 // pred_check
      _
    $region27: #{fwd.1} parent=1 // pred_check_branch
      %33 = sbr.rel (0) target = $region29
    $region28: #{fwd.1} parent=1 // pred_region
      _
    $region29: #{fwd.1} parent=1 // pred_fallthru
      _
    // Predicated region
    $region30: #{fwd.1} parent=1 // pred_check
      _
    $region31: #{fwd.1} parent=1 // pred_check_branch
      %35 = sbr.rel (0) target = $region33
    $region32: #{fwd.1} parent=1 // pred_region
      _
    $region33: #{fwd.1} parent=1 // pred_fallthru
      _
    // Predicated region
    $region34: #{fwd.1} parent=1 // pred_check
      _
    $region35: #{fwd.1} parent=1 // pred_check_branch
      %37 = sbr.rel (0) target = $region37
    $region36: #{fwd.1} parent=1 // pred_region
      %s39 = ssub.s32 6144, 6144
      %40 = vsyncadd [#allocation4], %s39
      %s41 = sshll.u32 [#allocation3], 4
      %s42 = int_to_ptr.vmem [resolvable:$true] %s41
      %47 = dma.hbm_to_vmem [thread:$0]  %s8, 6144, %s42, [#allocation4], 128, 128, 8
    $region37: #{fwd.1} parent=1 // pred_fallthru
      _
    // Predicated region
    $region38: #{fwd.1} parent=1 // pred_check
      _
    $region39: #{fwd.1} parent=1 // pred_check_branch
      %49 = sbr.rel (0) target = $region41
    $region40: #{fwd.1} parent=1 // pred_region
      %50 = dma.done [#allocation4], 6144
    $region41: #{fwd.1} parent=1 // pred_fallthru
      _
    %v52 = vld [vmem:[#allocation3] sm:$0xff]
    %v53 = vpack.c.bf16 %v52, %v52
    %v54 = vld [vmem:[#allocation3 + $0x8] sm:$0x1]
    %v55 = vld [vmem:[#allocation3 + $0x10] sm:$0xff]
    %v56 = vld [vmem:[#allocation3 + $0x18] sm:$0xff]
    %v57 = vpack.c.bf16 %v56, %v55
    %v58 = vld [vmem:[#allocation3 + $0x20] sm:$0x1]
    %v59 = vld [vmem:[#allocation3 + $0x28] sm:$0xff]
    %v60 = vld [vmem:[#allocation3 + $0x30] sm:$0xff]
    %v61 = vld [vmem:[#allocation3 + $0x38] sm:$0xff]
    %v62 = vld [vmem:[#allocation3 + $0x40] sm:$0xff]
    %v63 = vpack.c.bf16 %v60, %v59
    %v64 = vpack.c.bf16 %v62, %v61
    %v65 = vld [vmem:[#allocation3 + $0x48] sm:$0x1]
    %v66 = vld [vmem:[#allocation3 + $0x50] sm:$0xff]
    %v67 = vld [vmem:[#allocation3 + $0x58] sm:$0xff]
    %v68 = vpack.c.bf16 %v67, %v66
    %v69 = vld [vmem:[#allocation3 + $0x60] sm:$0x1]
    %v70 = vld [vmem:[#allocation3 + $0x68] sm:$0xff]
    %v71 = vld [vmem:[#allocation3 + $0x70] sm:$0xff]
    %v72 = vld [vmem:[#allocation3 + $0x78] sm:$0xff]
    %v73 = vld [vmem:[#allocation3 + $0x80] sm:$0xff]
    %v74 = vpack.c.bf16 %v71, %v70
    %v75 = vpack.c.bf16 %v73, %v72
    %v76 = vld [vmem:[#allocation3 + $0x88] sm:$0xff]
    %v77 = vld [vmem:[#allocation3 + $0x90] sm:$0xff]
    %v78 = vld [vmem:[#allocation3 + $0x98] sm:$0xff]
    %v79 = vld [vmem:[#allocation3 + $0xa0] sm:$0xff]
    %v80 = vpack.c.bf16 %v77, %v76
    %v81 = vpack.c.bf16 %v79, %v78
    %v82 = vld [vmem:[#allocation3 + $0xa8] sm:$0x1]
    %v83 = vld [vmem:[#allocation3 + $0xb0] sm:$0xff]
    %v84 = vld [vmem:[#allocation3 + $0xb8] sm:$0xff]
    %v85 = vpack.c.bf16 %v84, %v83
    %v86 = vld [vmem:[#allocation3 + $0xc0] sm:$0x1]
    %v87 = vld [vmem:[#allocation3 + $0xc8] sm:$0xff]
    %v88 = vld [vmem:[#allocation3 + $0xd0] sm:$0xff]
    %v89 = vld [vmem:[#allocation3 + $0xd8] sm:$0xff]
    %v90 = vld [vmem:[#allocation3 + $0xe0] sm:$0xff]
    %v91 = vpack.c.bf16 %v88, %v87
    %v92 = vpack.c.bf16 %v90, %v89
    %v93 = vld [vmem:[#allocation3 + $0xe8] sm:$0x1]
    %v94 = vld [vmem:[#allocation3 + $0xf0] sm:$0xff]
    %v95 = vld [vmem:[#allocation3 + $0xf8] sm:$0xff]
    %v96 = vld [vmem:[#allocation3 + $0x100] sm:$0xff]
    %v97 = vld [vmem:[#allocation3 + $0x108] sm:$0xff]
    %v98 = vpack.c.bf16 %v95, %v94
    %v99 = vpack.c.bf16 %v97, %v96
    %v100 = vld [vmem:[#allocation3 + $0x110] sm:$0x1]
    %v101 = vld [vmem:[#allocation3 + $0x118] sm:$0xff]
    %v102 = vld [vmem:[#allocation3 + $0x120] sm:$0xff]
    %v103 = vld [vmem:[#allocation3 + $0x128] sm:$0xff]
    %v104 = vld [vmem:[#allocation3 + $0x130] sm:$0xff]
    %v105 = vpack.c.bf16 %v102, %v101
    %v106 = vpack.c.bf16 %v104, %v103
    %v107 = vld [vmem:[#allocation3 + $0x138] sm:$0x1]
    %v108 = vld [vmem:[#allocation3 + $0x140] sm:$0xff]
    %v109 = vld [vmem:[#allocation3 + $0x148] sm:$0xff]
    %v110 = vld [vmem:[#allocation3 + $0x150] sm:$0xff]
    %v111 = vld [vmem:[#allocation3 + $0x158] sm:$0xff]
    %v112 = vpack.c.bf16 %v109, %v108
    %v113 = vpack.c.bf16 %v111, %v110
    %v114 = vld [vmem:[#allocation3 + $0x160] sm:$0x1]
    %v115 = vld [vmem:[#allocation3 + $0x168] sm:$0xff]
    %v116 = vld [vmem:[#allocation3 + $0x170] sm:$0xff]
    %v117 = vpack.c.bf16 %v116, %v115
    %v118 = vld [vmem:[#allocation3 + $0x178] sm:$0x1]
    %v119 = vld [vmem:[%s0] sm:$0xff]
    %v120 = vpack.c.bf16 %v119, %v119
    %v121 = vlaneseq
    %v122 = vshrl.u32 %v121, 7
    %v123 = vsub.s32 0, %v122
    %v124 = vrot.slane %v54, %v123
    %vm125 = vcmask 64512
    %v127 = vsel %vm125, %v120, 0
    %vm129 = vcmask 1043456
    %v131 = vsel %vm129, %v53, 0
    %133 = vmatprep.subr.bf16.mxu0 0
    %134 = vmatpush1.bf16.msra.mxu0 %v131
    %135 = vmatprep.subr.bf16.mxu0 0
    %136 = vmatpush1.bf16.msra.mxu0 0
    %137 = vmatprep.subr.bf16.mxu0 0
    %138 = vmatpush1.bf16.msra.mxu0 0
    %139 = vmatprep.subr.bf16.mxu0 0
    %140 = vmatpush1.bf16.msra.mxu0 0
    %141 = vmatprep.subr.bf16.mxu0 0
    %142 = vmatpush1.bf16.msra.mxu0 0
    %143 = vmatprep.subr.bf16.mxu0 0
    %144 = vmatpush1.bf16.msra.mxu0 0
    %145 = vmatprep.subr.bf16.mxu0 0
    %146 = vmatpush1.bf16.msra.mxu0 0
    %147 = vmatprep.subr.bf16.mxu0 0
    %148 = vmatpush1.bf16.msra.mxu0 0
    %149 = vmatprep.subr.bf16.mxu0 0
    %150 = vmatpush1.bf16.msra.mxu0 0
    %151 = vmatprep.subr.bf16.mxu0 0
    %152 = vmatpush1.bf16.msra.mxu0 0
    %153 = vmatprep.subr.bf16.mxu0 0
    %154 = vmatpush1.bf16.msra.mxu0 0
    %155 = vmatprep.subr.bf16.mxu0 0
    %156 = vmatpush1.bf16.msra.mxu0 0
    %157 = vmatprep.subr.bf16.mxu0 0
    %158 = vmatpush1.bf16.msra.mxu0 0
    %159 = vmatprep.subr.bf16.mxu0 0
    %160 = vmatpush1.bf16.msra.mxu0 0
    %161 = vmatprep.subr.bf16.mxu0 0
    %162 = vmatpush1.bf16.msra.mxu0 0
    %163 = vmatprep.subr.bf16.mxu0 0
    %164 = vmatpush1.bf16.msra.mxu0 0
    %165 = vmatprep.mubr.bf16.mxu0 0
    %166 = vmatmul.mubr.bf16.gmra.mrb[0].mxu0 %v127
    %v167 = vpop.f32.mrb[0].mxu0
    %v168 = vadd.f32 %v124, %v167
    %v169 = vpop.f32.mrb[0].mxu0
    %v170 = vpop.f32.mrb[0].mxu0
    %v171 = vpop.f32.mrb[0].mxu0
    %172 = vdwg.mxu0
    %v173 = vmax.f32 %v168, 0.0
    %v174 = vpack.c.bf16 %v173, %v173
    %v175 = vlaneseq
    %v176 = vshrl.u32 %v175, 7
    %v177 = vsub.s32 0, %v176
    %v178 = vrot.slane %v58, %v177
    %vm179 = vcmask 130048
    %v181 = vsel %vm179, %v174, 0
    %183 = vmatprep.subr.bf16.mxu0 0
    %184 = vmatpush1.bf16.msra.mxu0 %v57
    %185 = vmatprep.subr.bf16.mxu0 0
    %186 = vmatpush1.bf16.msra.mxu0 0
    %187 = vmatprep.subr.bf16.mxu0 0
    %188 = vmatpush1.bf16.msra.mxu0 0
    %189 = vmatprep.subr.bf16.mxu0 0
    %190 = vmatpush1.bf16.msra.mxu0 0
    %191 = vmatprep.subr.bf16.mxu0 0
    %192 = vmatpush1.bf16.msra.mxu0 0
    %193 = vmatprep.subr.bf16.mxu0 0
    %194 = vmatpush1.bf16.msra.mxu0 0
    %195 = vmatprep.subr.bf16.mxu0 0
    %196 = vmatpush1.bf16.msra.mxu0 0
    %197 = vmatprep.subr.bf16.mxu0 0
    %198 = vmatpush1.bf16.msra.mxu0 0
    %199 = vmatprep.subr.bf16.mxu0 0
    %200 = vmatpush1.bf16.msra.mxu0 0
    %201 = vmatprep.subr.bf16.mxu0 0
    %202 = vmatpush1.bf16.msra.mxu0 0
    %203 = vmatprep.subr.bf16.mxu0 0
    %204 = vmatpush1.bf16.msra.mxu0 0
    %205 = vmatprep.subr.bf16.mxu0 0
    %206 = vmatpush1.bf16.msra.mxu0 0
    %207 = vmatprep.subr.bf16.mxu0 0
    %208 = vmatpush1.bf16.msra.mxu0 0
    %209 = vmatprep.subr.bf16.mxu0 0
    %210 = vmatpush1.bf16.msra.mxu0 0
    %211 = vmatprep.subr.bf16.mxu0 0
    %212 = vmatpush1.bf16.msra.mxu0 0
    %213 = vmatprep.subr.bf16.mxu0 0
    %214 = vmatpush1.bf16.msra.mxu0 0
    %215 = vmatprep.mubr.bf16.mxu0 0
    %216 = vmatmul.mubr.bf16.gmra.mrb[0].mxu0 %v181
    %v217 = vpop.f32.mrb[0].mxu0
    %v218 = vadd.f32 %v178, %v217
    %v219 = vpop.f32.mrb[0].mxu0
    %v220 = vpop.f32.mrb[0].mxu0
    %v221 = vpop.f32.mrb[0].mxu0
    %222 = vdwg.mxu0
    %v223 = vtanh.pop %v218
    %v224 = vlaneseq
    %v225 = vshrl.u32 %v224, 7
    %v226 = vsub.s32 0, %v225
    %v227 = vrot.slane %v65, %v226
    %v228 = vlaneseq
    %v229 = vshrl.u32 %v228, 7
    %v230 = vsub.s32 0, %v229
    %v231 = vrot.slane %v69, %v230
    %vm232 = vcmask 261120
    %233 = vst.msk [vmem:[#allocation2] sm:$0xff] %vm232, %v223
    %v234 = vpack.c.bf16 %v223, %v223
    %v236 = vsel %vm232, %v234, 0
    %238 = vmatprep.subr.bf16.mxu0 0
    %239 = vmatpush1.bf16.msra.mxu0 %v63
    %240 = vmatprep.subr.bf16.mxu0 0
    %241 = vmatpush1.bf16.msra.mxu0 %v64
    %242 = vmatprep.subr.bf16.mxu0 0
    %243 = vmatpush1.bf16.msra.mxu0 0
    %244 = vmatprep.subr.bf16.mxu0 0
    %245 = vmatpush1.bf16.msra.mxu0 0
    %246 = vmatprep.subr.bf16.mxu0 0
    %247 = vmatpush1.bf16.msra.mxu0 0
    %248 = vmatprep.subr.bf16.mxu0 0
    %249 = vmatpush1.bf16.msra.mxu0 0
    %250 = vmatprep.subr.bf16.mxu0 0
    %251 = vmatpush1.bf16.msra.mxu0 0
    %252 = vmatprep.subr.bf16.mxu0 0
    %253 = vmatpush1.bf16.msra.mxu0 0
    %254 = vmatprep.subr.bf16.mxu0 0
    %255 = vmatpush1.bf16.msra.mxu0 0
    %256 = vmatprep.subr.bf16.mxu0 0
    %257 = vmatpush1.bf16.msra.mxu0 0
    %258 = vmatprep.subr.bf16.mxu0 0
    %259 = vmatpush1.bf16.msra.mxu0 0
    %260 = vmatprep.subr.bf16.mxu0 0
    %261 = vmatpush1.bf16.msra.mxu0 0
    %262 = vmatprep.subr.bf16.mxu0 0
    %263 = vmatpush1.bf16.msra.mxu0 0
    %264 = vmatprep.subr.bf16.mxu0 0
    %265 = vmatpush1.bf16.msra.mxu0 0
    %266 = vmatprep.subr.bf16.mxu0 0
    %267 = vmatpush1.bf16.msra.mxu0 0
    %268 = vmatprep.subr.bf16.mxu0 0
    %269 = vmatpush1.bf16.msra.mxu0 0
    %270 = vmatprep.mubr.bf16.mxu0 0
    %271 = vmatmul.mubr.bf16.gmra.mrb[0].mxu0 %v236
    %v272 = vpop.f32.mrb[0].mxu0
    %v273 = vadd.f32 %v227, %v272
    %v274 = vpop.f32.mrb[0].mxu0
    %v275 = vpop.f32.mrb[0].mxu0
    %v276 = vpop.f32.mrb[0].mxu0
    %277 = vdwg.mxu0
    %v278 = vmax.f32 %v273, 0.0
    %v279 = vpack.c.bf16 %v278, %v278
    %v281 = vsel %vm179, %v279, 0
    %283 = vmatprep.subr.bf16.mxu0 0
    %284 = vmatpush1.bf16.msra.mxu0 %v68
    %285 = vmatprep.subr.bf16.mxu0 0
    %286 = vmatpush1.bf16.msra.mxu0 0
    %287 = vmatprep.subr.bf16.mxu0 0
    %288 = vmatpush1.bf16.msra.mxu0 0
    %289 = vmatprep.subr.bf16.mxu0 0
    %290 = vmatpush1.bf16.msra.mxu0 0
    %291 = vmatprep.subr.bf16.mxu0 0
    %292 = vmatpush1.bf16.msra.mxu0 0
    %293 = vmatprep.subr.bf16.mxu0 0
    %294 = vmatpush1.bf16.msra.mxu0 0
    %295 = vmatprep.subr.bf16.mxu0 0
    %296 = vmatpush1.bf16.msra.mxu0 0
    %297 = vmatprep.subr.bf16.mxu0 0
    %298 = vmatpush1.bf16.msra.mxu0 0
    %299 = vmatprep.subr.bf16.mxu0 0
    %300 = vmatpush1.bf16.msra.mxu0 0
    %301 = vmatprep.subr.bf16.mxu0 0
    %302 = vmatpush1.bf16.msra.mxu0 0
    %303 = vmatprep.subr.bf16.mxu0 0
    %304 = vmatpush1.bf16.msra.mxu0 0
    %305 = vmatprep.subr.bf16.mxu0 0
    %306 = vmatpush1.bf16.msra.mxu0 0
    %307 = vmatprep.subr.bf16.mxu0 0
    %308 = vmatpush1.bf16.msra.mxu0 0
    %309 = vmatprep.subr.bf16.mxu0 0
    %310 = vmatpush1.bf16.msra.mxu0 0
    %311 = vmatprep.subr.bf16.mxu0 0
    %312 = vmatpush1.bf16.msra.mxu0 0
    %313 = vmatprep.subr.bf16.mxu0 0
    %314 = vmatpush1.bf16.msra.mxu0 0
    %315 = vmatprep.mubr.bf16.mxu0 0
    %316 = vmatmul.mubr.bf16.gmra.mrb[0].mxu0 %v281
    %v317 = vpop.f32.mrb[0].mxu0
    %v318 = vadd.f32 %v231, %v317
    %v319 = vpop.f32.mrb[0].mxu0
    %v320 = vpop.f32.mrb[0].mxu0
    %v321 = vpop.f32.mrb[0].mxu0
    %322 = vdwg.mxu0
    %324 = vrot.lane.b32.xlu0 %v273, 112
    %v325 = vpop.permute.xlu0 %324
    %v327 = vadd.f32 %v318, %v325
    %v328 = vxor.u32 %v327, 2147483648
    %v329 = vmul.f32 %v328, 1.442695
    %v330 = vpow.pop %v329
    %v331 = vadd.f32 %v330, 1.0
    %v332 = vrcp.pop %v331
    %v333 = vmul.f32 1.0, %v332
    %v334 = vmul.f32 %v333, %v223
    %v335 = vpack.c.bf16 %v334, %v334
    %v337 = vsel %vm232, %v335, 0
    %339 = vmatprep.subr.bf16.mxu0 0
    %340 = vmatpush1.bf16.msra.mxu0 %v74
    %341 = vmatprep.subr.bf16.mxu0 0
    %342 = vmatpush1.bf16.msra.mxu0 %v75
    %343 = vmatprep.subr.bf16.mxu0 0
    %344 = vmatpush1.bf16.msra.mxu0 0
    %345 = vmatprep.subr.bf16.mxu0 0
    %346 = vmatpush1.bf16.msra.mxu0 0
    %347 = vmatprep.subr.bf16.mxu0 0
    %348 = vmatpush1.bf16.msra.mxu0 0
    %349 = vmatprep.subr.bf16.mxu0 0
    %350 = vmatpush1.bf16.msra.mxu0 0
    %351 = vmatprep.subr.bf16.mxu0 0
    %352 = vmatpush1.bf16.msra.mxu0 0
    %353 = vmatprep.subr.bf16.mxu0 0
    %354 = vmatpush1.bf16.msra.mxu0 0
    %355 = vmatprep.subr.bf16.mxu0 0
    %356 = vmatpush1.bf16.msra.mxu0 0
    %357 = vmatprep.subr.bf16.mxu0 0
    %358 = vmatpush1.bf16.msra.mxu0 0
    %359 = vmatprep.subr.bf16.mxu0 0
    %360 = vmatpush1.bf16.msra.mxu0 0
    %361 = vmatprep.subr.bf16.mxu0 0
    %362 = vmatpush1.bf16.msra.mxu0 0
    %363 = vmatprep.subr.bf16.mxu0 0
    %364 = vmatpush1.bf16.msra.mxu0 0
    %365 = vmatprep.subr.bf16.mxu0 0
    %366 = vmatpush1.bf16.msra.mxu0 0
    %367 = vmatprep.subr.bf16.mxu0 0
    %368 = vmatpush1.bf16.msra.mxu0 0
    %369 = vmatprep.subr.bf16.mxu0 0
    %370 = vmatpush1.bf16.msra.mxu0 0
    %371 = vmatprep.mubr.bf16.mxu0 0
    %372 = vmatmul.mubr.bf16.gmra.mrb[0].mxu0 %v337
    %v373 = vpop.f32.mrb[0].mxu0
    %v374 = vadd.f32 0.0, %v373
    %v375 = vpop.f32.mrb[0].mxu0
    %v376 = vpop.f32.mrb[0].mxu0
    %v377 = vpop.f32.mrb[0].mxu0
    %378 = vdwg.mxu0
    %380 = vrot.lane.b32.xlu0 %v374, 64
    %v381 = vpop.permute.xlu0 %380
    %v383 = vadd.f32 %v318, %v381
    %v384 = vtanh.pop %v383
    %v385 = vsub.f32 1.0, %v333
    %387 = vrot.lane.b32.xlu0 %v223, 64
    %v388 = vpop.permute.xlu0 %387
    %v390 = vsub.f32 %v384, %v388
    %392 = vrot.lane.b32.xlu0 %v390, 96
    %v393 = vpop.permute.xlu0 %392
    %v395 = vmul.f32 %v385, %v393
    %v396 = vmul.f32 %v395, 0.1
    %398 = vrot.lane.b32.xlu0 %v396, 96
    %v399 = vpop.permute.xlu0 %398
    %v401 = vadd.f32 %v223, %v399
    %402 = vst.msk [vmem:[#allocation2 + $0x8] sm:$0xff] %vm232, %v401
    %v403 = vpack.c.bf16 %v401, %v401
    %v405 = vsel %vm232, %v403, 0
    %407 = vmatprep.subr.bf16.mxu0 0
    %408 = vmatpush1.bf16.msra.mxu0 %v63
    %409 = vmatprep.subr.bf16.mxu0 0
    %410 = vmatpush1.bf16.msra.mxu0 %v64
    %411 = vmatprep.subr.bf16.mxu0 0
    %412 = vmatpush1.bf16.msra.mxu0 0
    %413 = vmatprep.subr.bf16.mxu0 0
    %414 = vmatpush1.bf16.msra.mxu0 0
    %415 = vmatprep.subr.bf16.mxu0 0
    %416 = vmatpush1.bf16.msra.mxu0 0
    %417 = vmatprep.subr.bf16.mxu0 0
    %418 = vmatpush1.bf16.msra.mxu0 0
    %419 = vmatprep.subr.bf16.mxu0 0
    %420 = vmatpush1.bf16.msra.mxu0 0
    %421 = vmatprep.subr.bf16.mxu0 0
    %422 = vmatpush1.bf16.msra.mxu0 0
    %423 = vmatprep.subr.bf16.mxu0 0
    %424 = vmatpush1.bf16.msra.mxu0 0
    %425 = vmatprep.subr.bf16.mxu0 0
    %426 = vmatpush1.bf16.msra.mxu0 0
    %427 = vmatprep.subr.bf16.mxu0 0
    %428 = vmatpush1.bf16.msra.mxu0 0
    %429 = vmatprep.subr.bf16.mxu0 0
    %430 = vmatpush1.bf16.msra.mxu0 0
    %431 = vmatprep.subr.bf16.mxu0 0
    %432 = vmatpush1.bf16.msra.mxu0 0
    %433 = vmatprep.subr.bf16.mxu0 0
    %434 = vmatpush1.bf16.msra.mxu0 0
    %435 = vmatprep.subr.bf16.mxu0 0
    %436 = vmatpush1.bf16.msra.mxu0 0
    %437 = vmatprep.subr.bf16.mxu0 0
    %438 = vmatpush1.bf16.msra.mxu0 0
    %439 = vmatprep.mubr.bf16.mxu0 0
    %440 = vmatmul.mubr.bf16.gmra.mrb[0].mxu0 %v405
    %v441 = vpop.f32.mrb[0].mxu0
    %v442 = vadd.f32 %v227, %v441
    %v443 = vpop.f32.mrb[0].mxu0
    %v444 = vpop.f32.mrb[0].mxu0
    %v445 = vpop.f32.mrb[0].mxu0
    %446 = vdwg.mxu0
    %v447 = vmax.f32 %v442, 0.0
    %v448 = vpack.c.bf16 %v447, %v447
    %v450 = vsel %vm179, %v448, 0
    %452 = vmatprep.subr.bf16.mxu0 0
    %453 = vmatpush1.bf16.msra.mxu0 %v68
    %454 = vmatprep.subr.bf16.mxu0 0
    %455 = vmatpush1.bf16.msra.mxu0 0
    %456 = vmatprep.subr.bf16.mxu0 0
    %457 = vmatpush1.bf16.msra.mxu0 0
    %458 = vmatprep.subr.bf16.mxu0 0
    %459 = vmatpush1.bf16.msra.mxu0 0
    %460 = vmatprep.subr.bf16.mxu0 0
    %461 = vmatpush1.bf16.msra.mxu0 0
    %462 = vmatprep.subr.bf16.mxu0 0
    %463 = vmatpush1.bf16.msra.mxu0 0
    %464 = vmatprep.subr.bf16.mxu0 0
    %465 = vmatpush1.bf16.msra.mxu0 0
    %466 = vmatprep.subr.bf16.mxu0 0
    %467 = vmatpush1.bf16.msra.mxu0 0
    %468 = vmatprep.subr.bf16.mxu0 0
    %469 = vmatpush1.bf16.msra.mxu0 0
    %470 = vmatprep.subr.bf16.mxu0 0
    %471 = vmatpush1.bf16.msra.mxu0 0
    %472 = vmatprep.subr.bf16.mxu0 0
    %473 = vmatpush1.bf16.msra.mxu0 0
    %474 = vmatprep.subr.bf16.mxu0 0
    %475 = vmatpush1.bf16.msra.mxu0 0
    %476 = vmatprep.subr.bf16.mxu0 0
    %477 = vmatpush1.bf16.msra.mxu0 0
    %478 = vmatprep.subr.bf16.mxu0 0
    %479 = vmatpush1.bf16.msra.mxu0 0
    %480 = vmatprep.subr.bf16.mxu0 0
    %481 = vmatpush1.bf16.msra.mxu0 0
    %482 = vmatprep.subr.bf16.mxu0 0
    %483 = vmatpush1.bf16.msra.mxu0 0
    %484 = vmatprep.mubr.bf16.mxu0 0
    %485 = vmatmul.mubr.bf16.gmra.mrb[0].mxu0 %v450
    %v486 = vpop.f32.mrb[0].mxu0
    %v487 = vadd.f32 %v231, %v486
    %v488 = vpop.f32.mrb[0].mxu0
    %v489 = vpop.f32.mrb[0].mxu0
    %v490 = vpop.f32.mrb[0].mxu0
    %491 = vdwg.mxu0
    %493 = vrot.lane.b32.xlu0 %v442, 112
    %v494 = vpop.permute.xlu0 %493
    %v496 = vadd.f32 %v487, %v494
    %v497 = vxor.u32 %v496, 2147483648
    %v498 = vmul.f32 %v497, 1.442695
    %v499 = vpow.pop %v498
    %v500 = vadd.f32 %v499, 1.0
    %v501 = vrcp.pop %v500
    %v502 = vmul.f32 1.0, %v501
    %v503 = vmul.f32 %v502, %v401
    %v504 = vpack.c.bf16 %v503, %v503
    %v506 = vsel %vm232, %v504, 0
    %508 = vmatprep.subr.bf16.mxu0 0
    %509 = vmatpush1.bf16.msra.mxu0 %v74
    %510 = vmatprep.subr.bf16.mxu0 0
    %511 = vmatpush1.bf16.msra.mxu0 %v75
    %512 = vmatprep.subr.bf16.mxu0 0
    %513 = vmatpush1.bf16.msra.mxu0 0
    %514 = vmatprep.subr.bf16.mxu0 0
    %515 = vmatpush1.bf16.msra.mxu0 0
    %516 = vmatprep.subr.bf16.mxu0 0
    %517 = vmatpush1.bf16.msra.mxu0 0
    %518 = vmatprep.subr.bf16.mxu0 0
    %519 = vmatpush1.bf16.msra.mxu0 0
    %520 = vmatprep.subr.bf16.mxu0 0
    %521 = vmatpush1.bf16.msra.mxu0 0
    %522 = vmatprep.subr.bf16.mxu0 0
    %523 = vmatpush1.bf16.msra.mxu0 0
    %524 = vmatprep.subr.bf16.mxu0 0
    %525 = vmatpush1.bf16.msra.mxu0 0
    %526 = vmatprep.subr.bf16.mxu0 0
    %527 = vmatpush1.bf16.msra.mxu0 0
    %528 = vmatprep.subr.bf16.mxu0 0
    %529 = vmatpush1.bf16.msra.mxu0 0
    %530 = vmatprep.subr.bf16.mxu0 0
    %531 = vmatpush1.bf16.msra.mxu0 0
    %532 = vmatprep.subr.bf16.mxu0 0
    %533 = vmatpush1.bf16.msra.mxu0 0
    %534 = vmatprep.subr.bf16.mxu0 0
    %535 = vmatpush1.bf16.msra.mxu0 0
    %536 = vmatprep.subr.bf16.mxu0 0
    %537 = vmatpush1.bf16.msra.mxu0 0
    %538 = vmatprep.subr.bf16.mxu0 0
    %539 = vmatpush1.bf16.msra.mxu0 0
    %540 = vmatprep.mubr.bf16.mxu0 0
    %541 = vmatmul.mubr.bf16.gmra.mrb[0].mxu0 %v506
    %v542 = vpop.f32.mrb[0].mxu0
    %v543 = vadd.f32 0.0, %v542
    %v544 = vpop.f32.mrb[0].mxu0
    %v545 = vpop.f32.mrb[0].mxu0
    %v546 = vpop.f32.mrb[0].mxu0
    %547 = vdwg.mxu0
    %549 = vrot.lane.b32.xlu0 %v543, 64
    %v550 = vpop.permute.xlu0 %549
    %v552 = vadd.f32 %v487, %v550
    %v553 = vtanh.pop %v552
    %v554 = vsub.f32 1.0, %v502
    %556 = vrot.lane.b32.xlu0 %v401, 64
    %v557 = vpop.permute.xlu0 %556
    %v559 = vsub.f32 %v553, %v557
    %561 = vrot.lane.b32.xlu0 %v559, 96
    %v562 = vpop.permute.xlu0 %561
    %v564 = vmul.f32 %v554, %v562
    %v565 = vmul.f32 %v564, 0.15
    %567 = vrot.lane.b32.xlu0 %v565, 96
    %v568 = vpop.permute.xlu0 %567
    %v570 = vadd.f32 %v401, %v568
    %571 = vst.msk [vmem:[#allocation2 + $0x10] sm:$0xff] %vm232, %v570
    %v572 = vpack.c.bf16 %v570, %v570
    %v574 = vsel %vm232, %v572, 0
    %576 = vmatprep.subr.bf16.mxu0 0
    %577 = vmatpush1.bf16.msra.mxu0 %v63
    %578 = vmatprep.subr.bf16.mxu0 0
    %579 = vmatpush1.bf16.msra.mxu0 %v64
    %580 = vmatprep.subr.bf16.mxu0 0
    %581 = vmatpush1.bf16.msra.mxu0 0
    %582 = vmatprep.subr.bf16.mxu0 0
    %583 = vmatpush1.bf16.msra.mxu0 0
    %584 = vmatprep.subr.bf16.mxu0 0
    %585 = vmatpush1.bf16.msra.mxu0 0
    %586 = vmatprep.subr.bf16.mxu0 0
    %587 = vmatpush1.bf16.msra.mxu0 0
    %588 = vmatprep.subr.bf16.mxu0 0
    %589 = vmatpush1.bf16.msra.mxu0 0
    %590 = vmatprep.subr.bf16.mxu0 0
    %591 = vmatpush1.bf16.msra.mxu0 0
    %592 = vmatprep.subr.bf16.mxu0 0
    %593 = vmatpush1.bf16.msra.mxu0 0
    %594 = vmatprep.subr.bf16.mxu0 0
    %595 = vmatpush1.bf16.msra.mxu0 0
    %596 = vmatprep.subr.bf16.mxu0 0
    %597 = vmatpush1.bf16.msra.mxu0 0
    %598 = vmatprep.subr.bf16.mxu0 0
    %599 = vmatpush1.bf16.msra.mxu0 0
    %600 = vmatprep.subr.bf16.mxu0 0
    %601 = vmatpush1.bf16.msra.mxu0 0
    %602 = vmatprep.subr.bf16.mxu0 0
    %603 = vmatpush1.bf16.msra.mxu0 0
    %604 = vmatprep.subr.bf16.mxu0 0
    %605 = vmatpush1.bf16.msra.mxu0 0
    %606 = vmatprep.subr.bf16.mxu0 0
    %607 = vmatpush1.bf16.msra.mxu0 0
    %608 = vmatprep.mubr.bf16.mxu0 0
    %609 = vmatmul.mubr.bf16.gmra.mrb[0].mxu0 %v574
    %v610 = vpop.f32.mrb[0].mxu0
    %v611 = vadd.f32 %v227, %v610
    %v612 = vpop.f32.mrb[0].mxu0
    %v613 = vpop.f32.mrb[0].mxu0
    %v614 = vpop.f32.mrb[0].mxu0
    %615 = vdwg.mxu0
    %v616 = vmax.f32 %v611, 0.0
    %v617 = vpack.c.bf16 %v616, %v616
    %v619 = vsel %vm179, %v617, 0
    %621 = vmatprep.subr.bf16.mxu0 0
    %622 = vmatpush1.bf16.msra.mxu0 %v68
    %623 = vmatprep.subr.bf16.mxu0 0
    %624 = vmatpush1.bf16.msra.mxu0 0
    %625 = vmatprep.subr.bf16.mxu0 0
    %626 = vmatpush1.bf16.msra.mxu0 0
    %627 = vmatprep.subr.bf16.mxu0 0
    %628 = vmatpush1.bf16.msra.mxu0 0
    %629 = vmatprep.subr.bf16.mxu0 0
    %630 = vmatpush1.bf16.msra.mxu0 0
    %631 = vmatprep.subr.bf16.mxu0 0
    %632 = vmatpush1.bf16.msra.mxu0 0
    %633 = vmatprep.subr.bf16.mxu0 0
    %634 = vmatpush1.bf16.msra.mxu0 0
    %635 = vmatprep.subr.bf16.mxu0 0
    %636 = vmatpush1.bf16.msra.mxu0 0
    %637 = vmatprep.subr.bf16.mxu0 0
    %638 = vmatpush1.bf16.msra.mxu0 0
    %639 = vmatprep.subr.bf16.mxu0 0
    %640 = vmatpush1.bf16.msra.mxu0 0
    %641 = vmatprep.subr.bf16.mxu0 0
    %642 = vmatpush1.bf16.msra.mxu0 0
    %643 = vmatprep.subr.bf16.mxu0 0
    %644 = vmatpush1.bf16.msra.mxu0 0
    %645 = vmatprep.subr.bf16.mxu0 0
    %646 = vmatpush1.bf16.msra.mxu0 0
    %647 = vmatprep.subr.bf16.mxu0 0
    %648 = vmatpush1.bf16.msra.mxu0 0
    %649 = vmatprep.subr.bf16.mxu0 0
    %650 = vmatpush1.bf16.msra.mxu0 0
    %651 = vmatprep.subr.bf16.mxu0 0
    %652 = vmatpush1.bf16.msra.mxu0 0
    %653 = vmatprep.mubr.bf16.mxu0 0
    %654 = vmatmul.mubr.bf16.gmra.mrb[0].mxu0 %v619
    %v655 = vpop.f32.mrb[0].mxu0
    %v656 = vadd.f32 %v231, %v655
    %v657 = vpop.f32.mrb[0].mxu0
    %v658 = vpop.f32.mrb[0].mxu0
    %v659 = vpop.f32.mrb[0].mxu0
    %660 = vdwg.mxu0
    %662 = vrot.lane.b32.xlu0 %v611, 112
    %v663 = vpop.permute.xlu0 %662
    %v665 = vadd.f32 %v656, %v663
    %v666 = vxor.u32 %v665, 2147483648
    %v667 = vmul.f32 %v666, 1.442695
    %v668 = vpow.pop %v667
    %v669 = vadd.f32 %v668, 1.0
    %v670 = vrcp.pop %v669
    %v671 = vmul.f32 1.0, %v670
    %v672 = vmul.f32 %v671, %v570
    %v673 = vpack.c.bf16 %v672, %v672
    %v675 = vsel %vm232, %v673, 0
    %677 = vmatprep.subr.bf16.mxu0 0
    %678 = vmatpush1.bf16.msra.mxu0 %v74
    %679 = vmatprep.subr.bf16.mxu0 0
    %680 = vmatpush1.bf16.msra.mxu0 %v75
    %681 = vmatprep.subr.bf16.mxu0 0
    %682 = vmatpush1.bf16.msra.mxu0 0
    %683 = vmatprep.subr.bf16.mxu0 0
    %684 = vmatpush1.bf16.msra.mxu0 0
    %685 = vmatprep.subr.bf16.mxu0 0
    %686 = vmatpush1.bf16.msra.mxu0 0
    %687 = vmatprep.subr.bf16.mxu0 0
    %688 = vmatpush1.bf16.msra.mxu0 0
    %689 = vmatprep.subr.bf16.mxu0 0
    %690 = vmatpush1.bf16.msra.mxu0 0
    %691 = vmatprep.subr.bf16.mxu0 0
    %692 = vmatpush1.bf16.msra.mxu0 0
    %693 = vmatprep.subr.bf16.mxu0 0
    %694 = vmatpush1.bf16.msra.mxu0 0
    %695 = vmatprep.subr.bf16.mxu0 0
    %696 = vmatpush1.bf16.msra.mxu0 0
    %697 = vmatprep.subr.bf16.mxu0 0
    %698 = vmatpush1.bf16.msra.mxu0 0
    %699 = vmatprep.subr.bf16.mxu0 0
    %700 = vmatpush1.bf16.msra.mxu0 0
    %701 = vmatprep.subr.bf16.mxu0 0
    %702 = vmatpush1.bf16.msra.mxu0 0
    %703 = vmatprep.subr.bf16.mxu0 0
    %704 = vmatpush1.bf16.msra.mxu0 0
    %705 = vmatprep.subr.bf16.mxu0 0
    %706 = vmatpush1.bf16.msra.mxu0 0
    %707 = vmatprep.subr.bf16.mxu0 0
    %708 = vmatpush1.bf16.msra.mxu0 0
    %709 = vmatprep.mubr.bf16.mxu0 0
    %710 = vmatmul.mubr.bf16.gmra.mrb[0].mxu0 %v675
    %v711 = vpop.f32.mrb[0].mxu0
    %v712 = vadd.f32 0.0, %v711
    %v713 = vpop.f32.mrb[0].mxu0
    %v714 = vpop.f32.mrb[0].mxu0
    %v715 = vpop.f32.mrb[0].mxu0
    %716 = vdwg.mxu0
    %718 = vrot.lane.b32.xlu0 %v712, 64
    %v719 = vpop.permute.xlu0 %718
    %v721 = vadd.f32 %v656, %v719
    %v722 = vtanh.pop %v721
    %v723 = vsub.f32 1.0, %v671
    %725 = vrot.lane.b32.xlu0 %v570, 64
    %v726 = vpop.permute.xlu0 %725
    %v728 = vsub.f32 %v722, %v726
    %730 = vrot.lane.b32.xlu0 %v728, 96
    %v731 = vpop.permute.xlu0 %730
    %v733 = vmul.f32 %v723, %v731
    %v734 = vmul.f32 %v733, 0.15
    %736 = vrot.lane.b32.xlu0 %v734, 96
    %v737 = vpop.permute.xlu0 %736
    %v739 = vadd.f32 %v570, %v737
    %740 = vst.msk [vmem:[#allocation2 + $0x18] sm:$0xff] %vm232, %v739
    %v741 = vpack.c.bf16 %v739, %v739
    %v743 = vsel %vm232, %v741, 0
    %745 = vmatprep.subr.bf16.mxu0 0
    %746 = vmatpush1.bf16.msra.mxu0 %v63
    %747 = vmatprep.subr.bf16.mxu0 0
    %748 = vmatpush1.bf16.msra.mxu0 %v64
    %749 = vmatprep.subr.bf16.mxu0 0
    %750 = vmatpush1.bf16.msra.mxu0 0
    %751 = vmatprep.subr.bf16.mxu0 0
    %752 = vmatpush1.bf16.msra.mxu0 0
    %753 = vmatprep.subr.bf16.mxu0 0
    %754 = vmatpush1.bf16.msra.mxu0 0
    %755 = vmatprep.subr.bf16.mxu0 0
    %756 = vmatpush1.bf16.msra.mxu0 0
    %757 = vmatprep.subr.bf16.mxu0 0
    %758 = vmatpush1.bf16.msra.mxu0 0
    %759 = vmatprep.subr.bf16.mxu0 0
    %760 = vmatpush1.bf16.msra.mxu0 0
    %761 = vmatprep.subr.bf16.mxu0 0
    %762 = vmatpush1.bf16.msra.mxu0 0
    %763 = vmatprep.subr.bf16.mxu0 0
    %764 = vmatpush1.bf16.msra.mxu0 0
    %765 = vmatprep.subr.bf16.mxu0 0
    %766 = vmatpush1.bf16.msra.mxu0 0
    %767 = vmatprep.subr.bf16.mxu0 0
    %768 = vmatpush1.bf16.msra.mxu0 0
    %769 = vmatprep.subr.bf16.mxu0 0
    %770 = vmatpush1.bf16.msra.mxu0 0
    %771 = vmatprep.subr.bf16.mxu0 0
    %772 = vmatpush1.bf16.msra.mxu0 0
    %773 = vmatprep.subr.bf16.mxu0 0
    %774 = vmatpush1.bf16.msra.mxu0 0
    %775 = vmatprep.subr.bf16.mxu0 0
    %776 = vmatpush1.bf16.msra.mxu0 0
    %777 = vmatprep.mubr.bf16.mxu0 0
    %778 = vmatmul.mubr.bf16.gmra.mrb[0].mxu0 %v743
    %v779 = vpop.f32.mrb[0].mxu0
    %v780 = vadd.f32 %v227, %v779
    %v781 = vpop.f32.mrb[0].mxu0
    %v782 = vpop.f32.mrb[0].mxu0
    %v783 = vpop.f32.mrb[0].mxu0
    %784 = vdwg.mxu0
    %v785 = vmax.f32 %v780, 0.0
    %v786 = vpack.c.bf16 %v785, %v785
    %v788 = vsel %vm179, %v786, 0
    %790 = vmatprep.subr.bf16.mxu0 0
    %791 = vmatpush1.bf16.msra.mxu0 %v68
    %792 = vmatprep.subr.bf16.mxu0 0
    %793 = vmatpush1.bf16.msra.mxu0 0
    %794 = vmatprep.subr.bf16.mxu0 0
    %795 = vmatpush1.bf16.msra.mxu0 0
    %796 = vmatprep.subr.bf16.mxu0 0
    %797 = vmatpush1.bf16.msra.mxu0 0
    %798 = vmatprep.subr.bf16.mxu0 0
    %799 = vmatpush1.bf16.msra.mxu0 0
    %800 = vmatprep.subr.bf16.mxu0 0
    %801 = vmatpush1.bf16.msra.mxu0 0
    %802 = vmatprep.subr.bf16.mxu0 0
    %803 = vmatpush1.bf16.msra.mxu0 0
    %804 = vmatprep.subr.bf16.mxu0 0
    %805 = vmatpush1.bf16.msra.mxu0 0
    %806 = vmatprep.subr.bf16.mxu0 0
    %807 = vmatpush1.bf16.msra.mxu0 0
    %808 = vmatprep.subr.bf16.mxu0 0
    %809 = vmatpush1.bf16.msra.mxu0 0
    %810 = vmatprep.subr.bf16.mxu0 0
    %811 = vmatpush1.bf16.msra.mxu0 0
    %812 = vmatprep.subr.bf16.mxu0 0
    %813 = vmatpush1.bf16.msra.mxu0 0
    %814 = vmatprep.subr.bf16.mxu0 0
    %815 = vmatpush1.bf16.msra.mxu0 0
    %816 = vmatprep.subr.bf16.mxu0 0
    %817 = vmatpush1.bf16.msra.mxu0 0
    %818 = vmatprep.subr.bf16.mxu0 0
    %819 = vmatpush1.bf16.msra.mxu0 0
    %820 = vmatprep.subr.bf16.mxu0 0
    %821 = vmatpush1.bf16.msra.mxu0 0
    %822 = vmatprep.mubr.bf16.mxu0 0
    %823 = vmatmul.mubr.bf16.gmra.mrb[0].mxu0 %v788
    %v824 = vpop.f32.mrb[0].mxu0
    %v825 = vadd.f32 %v231, %v824
    %v826 = vpop.f32.mrb[0].mxu0
    %v827 = vpop.f32.mrb[0].mxu0
    %v828 = vpop.f32.mrb[0].mxu0
    %829 = vdwg.mxu0
    %831 = vrot.lane.b32.xlu0 %v780, 112
    %v832 = vpop.permute.xlu0 %831
    %v834 = vadd.f32 %v825, %v832
    %v835 = vxor.u32 %v834, 2147483648
    %v836 = vmul.f32 %v835, 1.442695
    %v837 = vpow.pop %v836
    %v838 = vadd.f32 %v837, 1.0
    %v839 = vrcp.pop %v838
    %v840 = vmul.f32 1.0, %v839
    %v841 = vmul.f32 %v840, %v739
    %v842 = vpack.c.bf16 %v841, %v841
    %v844 = vsel %vm232, %v842, 0
    %846 = vmatprep.subr.bf16.mxu0 0
    %847 = vmatpush1.bf16.msra.mxu0 %v74
    %848 = vmatprep.subr.bf16.mxu0 0
    %849 = vmatpush1.bf16.msra.mxu0 %v75
    %850 = vmatprep.subr.bf16.mxu0 0
    %851 = vmatpush1.bf16.msra.mxu0 0
    %852 = vmatprep.subr.bf16.mxu0 0
    %853 = vmatpush1.bf16.msra.mxu0 0
    %854 = vmatprep.subr.bf16.mxu0 0
    %855 = vmatpush1.bf16.msra.mxu0 0
    %856 = vmatprep.subr.bf16.mxu0 0
    %857 = vmatpush1.bf16.msra.mxu0 0
    %858 = vmatprep.subr.bf16.mxu0 0
    %859 = vmatpush1.bf16.msra.mxu0 0
    %860 = vmatprep.subr.bf16.mxu0 0
    %861 = vmatpush1.bf16.msra.mxu0 0
    %862 = vmatprep.subr.bf16.mxu0 0
    %863 = vmatpush1.bf16.msra.mxu0 0
    %864 = vmatprep.subr.bf16.mxu0 0
    %865 = vmatpush1.bf16.msra.mxu0 0
    %866 = vmatprep.subr.bf16.mxu0 0
    %867 = vmatpush1.bf16.msra.mxu0 0
    %868 = vmatprep.subr.bf16.mxu0 0
    %869 = vmatpush1.bf16.msra.mxu0 0
    %870 = vmatprep.subr.bf16.mxu0 0
    %871 = vmatpush1.bf16.msra.mxu0 0
    %872 = vmatprep.subr.bf16.mxu0 0
    %873 = vmatpush1.bf16.msra.mxu0 0
    %874 = vmatprep.subr.bf16.mxu0 0
    %875 = vmatpush1.bf16.msra.mxu0 0
    %876 = vmatprep.subr.bf16.mxu0 0
    %877 = vmatpush1.bf16.msra.mxu0 0
    %878 = vmatprep.mubr.bf16.mxu0 0
    %879 = vmatmul.mubr.bf16.gmra.mrb[0].mxu0 %v844
    %v880 = vpop.f32.mrb[0].mxu0
    %v881 = vadd.f32 0.0, %v880
    %v882 = vpop.f32.mrb[0].mxu0
    %v883 = vpop.f32.mrb[0].mxu0
    %v884 = vpop.f32.mrb[0].mxu0
    %885 = vdwg.mxu0
    %887 = vrot.lane.b32.xlu0 %v881, 64
    %v888 = vpop.permute.xlu0 %887
    %v890 = vadd.f32 %v825, %v888
    %v891 = vtanh.pop %v890
    %v892 = vsub.f32 1.0, %v840
    %894 = vrot.lane.b32.xlu0 %v739, 64
    %v895 = vpop.permute.xlu0 %894
    %v897 = vsub.f32 %v891, %v895
    %899 = vrot.lane.b32.xlu0 %v897, 96
    %v900 = vpop.permute.xlu0 %899
    %v902 = vmul.f32 %v892, %v900
    %v903 = vmul.f32 %v902, 0.20000002
    %905 = vrot.lane.b32.xlu0 %v903, 96
    %v906 = vpop.permute.xlu0 %905
    %v908 = vadd.f32 %v739, %v906
    %909 = vst.msk [vmem:[#allocation2 + $0x20] sm:$0xff] %vm232, %v908
    %v910 = vpack.c.bf16 %v908, %v908
    %v912 = vsel %vm232, %v910, 0
    %914 = vmatprep.subr.bf16.mxu0 0
    %915 = vmatpush1.bf16.msra.mxu0 %v63
    %916 = vmatprep.subr.bf16.mxu0 0
    %917 = vmatpush1.bf16.msra.mxu0 %v64
    %918 = vmatprep.subr.bf16.mxu0 0
    %919 = vmatpush1.bf16.msra.mxu0 0
    %920 = vmatprep.subr.bf16.mxu0 0
    %921 = vmatpush1.bf16.msra.mxu0 0
    %922 = vmatprep.subr.bf16.mxu0 0
    %923 = vmatpush1.bf16.msra.mxu0 0
    %924 = vmatprep.subr.bf16.mxu0 0
    %925 = vmatpush1.bf16.msra.mxu0 0
    %926 = vmatprep.subr.bf16.mxu0 0
    %927 = vmatpush1.bf16.msra.mxu0 0
    %928 = vmatprep.subr.bf16.mxu0 0
    %929 = vmatpush1.bf16.msra.mxu0 0
    %930 = vmatprep.subr.bf16.mxu0 0
    %931 = vmatpush1.bf16.msra.mxu0 0
    %932 = vmatprep.subr.bf16.mxu0 0
    %933 = vmatpush1.bf16.msra.mxu0 0
    %934 = vmatprep.subr.bf16.mxu0 0
    %935 = vmatpush1.bf16.msra.mxu0 0
    %936 = vmatprep.subr.bf16.mxu0 0
    %937 = vmatpush1.bf16.msra.mxu0 0
    %938 = vmatprep.subr.bf16.mxu0 0
    %939 = vmatpush1.bf16.msra.mxu0 0
    %940 = vmatprep.subr.bf16.mxu0 0
    %941 = vmatpush1.bf16.msra.mxu0 0
    %942 = vmatprep.subr.bf16.mxu0 0
    %943 = vmatpush1.bf16.msra.mxu0 0
    %944 = vmatprep.subr.bf16.mxu0 0
    %945 = vmatpush1.bf16.msra.mxu0 0
    %946 = vmatprep.mubr.bf16.mxu0 0
    %947 = vmatmul.mubr.bf16.gmra.mrb[0].mxu0 %v912
    %v948 = vpop.f32.mrb[0].mxu0
    %v949 = vadd.f32 %v227, %v948
    %v950 = vpop.f32.mrb[0].mxu0
    %v951 = vpop.f32.mrb[0].mxu0
    %v952 = vpop.f32.mrb[0].mxu0
    %953 = vdwg.mxu0
    %v954 = vmax.f32 %v949, 0.0
    %v955 = vpack.c.bf16 %v954, %v954
    %v957 = vsel %vm179, %v955, 0
    %959 = vmatprep.subr.bf16.mxu0 0
    %960 = vmatpush1.bf16.msra.mxu0 %v68
    %961 = vmatprep.subr.bf16.mxu0 0
    %962 = vmatpush1.bf16.msra.mxu0 0
    %963 = vmatprep.subr.bf16.mxu0 0
    %964 = vmatpush1.bf16.msra.mxu0 0
    %965 = vmatprep.subr.bf16.mxu0 0
    %966 = vmatpush1.bf16.msra.mxu0 0
    %967 = vmatprep.subr.bf16.mxu0 0
    %968 = vmatpush1.bf16.msra.mxu0 0
    %969 = vmatprep.subr.bf16.mxu0 0
    %970 = vmatpush1.bf16.msra.mxu0 0
    %971 = vmatprep.subr.bf16.mxu0 0
    %972 = vmatpush1.bf16.msra.mxu0 0
    %973 = vmatprep.subr.bf16.mxu0 0
    %974 = vmatpush1.bf16.msra.mxu0 0
    %975 = vmatprep.subr.bf16.mxu0 0
    %976 = vmatpush1.bf16.msra.mxu0 0
    %977 = vmatprep.subr.bf16.mxu0 0
    %978 = vmatpush1.bf16.msra.mxu0 0
    %979 = vmatprep.subr.bf16.mxu0 0
    %980 = vmatpush1.bf16.msra.mxu0 0
    %981 = vmatprep.subr.bf16.mxu0 0
    %982 = vmatpush1.bf16.msra.mxu0 0
    %983 = vmatprep.subr.bf16.mxu0 0
    %984 = vmatpush1.bf16.msra.mxu0 0
    %985 = vmatprep.subr.bf16.mxu0 0
    %986 = vmatpush1.bf16.msra.mxu0 0
    %987 = vmatprep.subr.bf16.mxu0 0
    %988 = vmatpush1.bf16.msra.mxu0 0
    %989 = vmatprep.subr.bf16.mxu0 0
    %990 = vmatpush1.bf16.msra.mxu0 0
    %991 = vmatprep.mubr.bf16.mxu0 0
    %992 = vmatmul.mubr.bf16.gmra.mrb[0].mxu0 %v957
    %v993 = vpop.f32.mrb[0].mxu0
    %v994 = vadd.f32 %v231, %v993
    %v995 = vpop.f32.mrb[0].mxu0
    %v996 = vpop.f32.mrb[0].mxu0
    %v997 = vpop.f32.mrb[0].mxu0
    %998 = vdwg.mxu0
    %1000 = vrot.lane.b32.xlu0 %v949, 112
    %v1001 = vpop.permute.xlu0 %1000
    %v1003 = vadd.f32 %v994, %v1001
    %v1004 = vxor.u32 %v1003, 2147483648
    %v1005 = vmul.f32 %v1004, 1.442695
    %v1006 = vpow.pop %v1005
    %v1007 = vadd.f32 %v1006, 1.0
    %v1008 = vrcp.pop %v1007
    %v1009 = vmul.f32 1.0, %v1008
    %v1010 = vmul.f32 %v1009, %v908
    %v1011 = vpack.c.bf16 %v1010, %v1010
    %v1013 = vsel %vm232, %v1011, 0
    %1015 = vmatprep.subr.bf16.mxu0 0
    %1016 = vmatpush1.bf16.msra.mxu0 %v74
    %1017 = vmatprep.subr.bf16.mxu0 0
    %1018 = vmatpush1.bf16.msra.mxu0 %v75
    %1019 = vmatprep.subr.bf16.mxu0 0
    %1020 = vmatpush1.bf16.msra.mxu0 0
    %1021 = vmatprep.subr.bf16.mxu0 0
    %1022 = vmatpush1.bf16.msra.mxu0 0
    %1023 = vmatprep.subr.bf16.mxu0 0
    %1024 = vmatpush1.bf16.msra.mxu0 0
    %1025 = vmatprep.subr.bf16.mxu0 0
    %1026 = vmatpush1.bf16.msra.mxu0 0
    %1027 = vmatprep.subr.bf16.mxu0 0
    %1028 = vmatpush1.bf16.msra.mxu0 0
    %1029 = vmatprep.subr.bf16.mxu0 0
    %1030 = vmatpush1.bf16.msra.mxu0 0
    %1031 = vmatprep.subr.bf16.mxu0 0
    %1032 = vmatpush1.bf16.msra.mxu0 0
    %1033 = vmatprep.subr.bf16.mxu0 0
    %1034 = vmatpush1.bf16.msra.mxu0 0
    %1035 = vmatprep.subr.bf16.mxu0 0
    %1036 = vmatpush1.bf16.msra.mxu0 0
    %1037 = vmatprep.subr.bf16.mxu0 0
    %1038 = vmatpush1.bf16.msra.mxu0 0
    %1039 = vmatprep.subr.bf16.mxu0 0
    %1040 = vmatpush1.bf16.msra.mxu0 0
    %1041 = vmatprep.subr.bf16.mxu0 0
    %1042 = vmatpush1.bf16.msra.mxu0 0
    %1043 = vmatprep.subr.bf16.mxu0 0
    %1044 = vmatpush1.bf16.msra.mxu0 0
    %1045 = vmatprep.subr.bf16.mxu0 0
    %1046 = vmatpush1.bf16.msra.mxu0 0
    %1047 = vmatprep.mubr.bf16.mxu0 0
    %1048 = vmatmul.mubr.bf16.gmra.mrb[0].mxu0 %v1013
    %v1049 = vpop.f32.mrb[0].mxu0
    %v1050 = vadd.f32 0.0, %v1049
    %v1051 = vpop.f32.mrb[0].mxu0
    %v1052 = vpop.f32.mrb[0].mxu0
    %v1053 = vpop.f32.mrb[0].mxu0
    %1054 = vdwg.mxu0
    %1056 = vrot.lane.b32.xlu0 %v1050, 64
    %v1057 = vpop.permute.xlu0 %1056
    %v1059 = vadd.f32 %v994, %v1057
    %v1060 = vtanh.pop %v1059
    %v1061 = vsub.f32 1.0, %v1009
    %1063 = vrot.lane.b32.xlu0 %v908, 64
    %v1064 = vpop.permute.xlu0 %1063
    %v1066 = vsub.f32 %v1060, %v1064
    %1068 = vrot.lane.b32.xlu0 %v1066, 96
    %v1069 = vpop.permute.xlu0 %1068
    %v1071 = vmul.f32 %v1061, %v1069
    %v1072 = vmul.f32 %v1071, 0.25
    %1074 = vrot.lane.b32.xlu0 %v1072, 96
    %v1075 = vpop.permute.xlu0 %1074
    %v1077 = vadd.f32 %v908, %v1075
    %1078 = vst.msk [vmem:[#allocation2 + $0x28] sm:$0xff] %vm232, %v1077
    %v1079 = vld [vmem:[%s6] sm:$0xff]
    %v1080 = vld [vmem:[%s6 + $0x8] sm:$0xff]
    %v1081 = vld [vmem:[#allocation2] sm:$0xff]
    %v1082 = vld [vmem:[#allocation2 + $0x8] sm:$0xff]
    %v1083 = vld [vmem:[#allocation2 + $0x10] sm:$0xff]
    %v1084 = vld [vmem:[#allocation2 + $0x18] sm:$0xff]
    %v1085 = vld [vmem:[#allocation2 + $0x20] sm:$0xff]
    %v1086 = vld [vmem:[#allocation2 + $0x28] sm:$0xff]
    %vm1087 = vcmask 392192
    %v1089 = vsel %vm1087, %v1079, 0
    %v1092 = vsel %vm1087, %v1080, 0
    %1094 = vmatprep.subr.mxu0 0.0
    %1095 = vmatpush1.msra.mxu0 %v1081
    %1096 = vmatprep.subr.mxu0 0.0
    %1097 = vmatpush1.msra.mxu0 %v1082
    %1098 = vmatprep.subr.mxu0 0.0
    %1099 = vmatpush1.msra.mxu0 %v1083
    %1100 = vmatprep.subr.mxu0 0.0
    %1101 = vmatpush1.msra.mxu0 %v1084
    %1102 = vmatprep.subr.mxu0 0.0
    %1103 = vmatpush1.msra.mxu0 %v1085
    %1104 = vmatprep.subr.mxu0 0.0
    %1105 = vmatpush1.msra.mxu0 %v1086
    %1106 = vmatprep.subr.mxu0 0.0
    %1107 = vmatpush1.msra.mxu0 0.0
    %1108 = vmatprep.subr.mxu0 0.0
    %1109 = vmatpush1.msra.mxu0 0.0
    %1110 = vmatprep.subr.mxu0 0.0
    %1111 = vmatpush1.msra.mxu0 0.0
    %1112 = vmatprep.subr.mxu0 0.0
    %1113 = vmatpush1.msra.mxu0 0.0
    %1114 = vmatprep.subr.mxu0 0.0
    %1115 = vmatpush1.msra.mxu0 0.0
    %1116 = vmatprep.subr.mxu0 0.0
    %1117 = vmatpush1.msra.mxu0 0.0
    %1118 = vmatprep.subr.mxu0 0.0
    %1119 = vmatpush1.msra.mxu0 0.0
    %1120 = vmatprep.subr.mxu0 0.0
    %1121 = vmatpush1.msra.mxu0 0.0
    %1122 = vmatprep.subr.mxu0 0.0
    %1123 = vmatpush1.msra.mxu0 0.0
    %1124 = vmatprep.subr.mxu0 0.0
    %1125 = vmatpush1.msra.mxu0 0.0
    %1126 = vmatprep.subr.mxu0 0.0
    %1127 = vmatpush1.msra.mxu0 0.0
    %1128 = vmatprep.subr.mxu0 0.0
    %1129 = vmatpush1.msra.mxu0 0.0
    %1130 = vmatprep.subr.mxu0 0.0
    %1131 = vmatpush1.msra.mxu0 0.0
    %1132 = vmatprep.subr.mxu0 0.0
    %1133 = vmatpush1.msra.mxu0 0.0
    %1134 = vmatprep.subr.mxu0 0.0
    %1135 = vmatpush1.msra.mxu0 0.0
    %1136 = vmatprep.subr.mxu0 0.0
    %1137 = vmatpush1.msra.mxu0 0.0
    %1138 = vmatprep.subr.mxu0 0.0
    %1139 = vmatpush1.msra.mxu0 0.0
    %1140 = vmatprep.subr.mxu0 0.0
    %1141 = vmatpush1.msra.mxu0 0.0
    %1142 = vmatprep.subr.mxu0 0.0
    %1143 = vmatpush1.msra.mxu0 0.0
    %1144 = vmatprep.subr.mxu0 0.0
    %1145 = vmatpush1.msra.mxu0 0.0
    %1146 = vmatprep.subr.mxu0 0.0
    %1147 = vmatpush1.msra.mxu0 0.0
    %1148 = vmatprep.subr.mxu0 0.0
    %1149 = vmatpush1.msra.mxu0 0.0
    %1150 = vmatprep.subr.mxu0 0.0
    %1151 = vmatpush1.msra.mxu0 0.0
    %1152 = vmatprep.subr.mxu0 0.0
    %1153 = vmatpush1.msra.mxu0 0.0
    %1154 = vmatprep.subr.mxu0 0.0
    %1155 = vmatpush1.msra.mxu0 0.0
    %1156 = vmatprep.subr.mxu0 0.0
    %1157 = vmatpush1.msra.mxu0 0.0
    %1158 = vmatprep.mubr.f32.mxu0 0.0
    %1159 = vmatmul.mubr.f32.gmra.mrb[0].mxu0 %v1089
    %v1160 = vpop.f32.mrb[0].mxu0
    %v1161 = vadd.f32 0.0, %v1160
    %v1162 = vpop.f32.mrb[0].mxu0
    %1163 = vmatprep.mubr.f32.mxu0 0.0
    %1164 = vmatmul.mubr.f32.gmra.mrb[0].mxu0 %v1092
    %v1165 = vpop.f32.mrb[0].mxu0
    %v1166 = vadd.f32 0.0, %v1165
    %v1167 = vpop.f32.mrb[0].mxu0
    %1168 = vdwg.mxu0
    %v1169 = vld [vmem:[%s1] sm:$0xff]
    %v1170 = vld [vmem:[%s1 + $0x8] sm:$0xff]
    %v1171 = vld [vmem:[%s2] sm:$0xff]
    %v1172 = vld [vmem:[%s2 + $0x8] sm:$0xff]
    %v1173 = vpack.c.bf16 %v1166, %v1161
    %v1174 = vlaneseq
    %v1175 = vshrl.u32 %v1174, 7
    %v1176 = vsub.s32 0, %v1175
    %v1177 = vrot.slane %v82, %v1176
    %v1179 = vsel %vm232, %v1173, 0
    %1181 = vmatprep.subr.bf16.mxu0 0
    %1182 = vmatpush1.bf16.msra.mxu0 %v80
    %1183 = vmatprep.subr.bf16.mxu0 0
    %1184 = vmatpush1.bf16.msra.mxu0 %v81
    %1185 = vmatprep.subr.bf16.mxu0 0
    %1186 = vmatpush1.bf16.msra.mxu0 0
    %1187 = vmatprep.subr.bf16.mxu0 0
    %1188 = vmatpush1.bf16.msra.mxu0 0
    %1189 = vmatprep.subr.bf16.mxu0 0
    %1190 = vmatpush1.bf16.msra.mxu0 0
    %1191 = vmatprep.subr.bf16.mxu0 0
    %1192 = vmatpush1.bf16.msra.mxu0 0
    %1193 = vmatprep.subr.bf16.mxu0 0
    %1194 = vmatpush1.bf16.msra.mxu0 0
    %1195 = vmatprep.subr.bf16.mxu0 0
    %1196 = vmatpush1.bf16.msra.mxu0 0
    %1197 = vmatprep.subr.bf16.mxu0 0
    %1198 = vmatpush1.bf16.msra.mxu0 0
    %1199 = vmatprep.subr.bf16.mxu0 0
    %1200 = vmatpush1.bf16.msra.mxu0 0
    %1201 = vmatprep.subr.bf16.mxu0 0
    %1202 = vmatpush1.bf16.msra.mxu0 0
    %1203 = vmatprep.subr.bf16.mxu0 0
    %1204 = vmatpush1.bf16.msra.mxu0 0
    %1205 = vmatprep.subr.bf16.mxu0 0
    %1206 = vmatpush1.bf16.msra.mxu0 0
    %1207 = vmatprep.subr.bf16.mxu0 0
    %1208 = vmatpush1.bf16.msra.mxu0 0
    %1209 = vmatprep.subr.bf16.mxu0 0
    %1210 = vmatpush1.bf16.msra.mxu0 0
    %1211 = vmatprep.subr.bf16.mxu0 0
    %1212 = vmatpush1.bf16.msra.mxu0 0
    %1213 = vmatprep.mubr.bf16.mxu0 0
    %1214 = vmatmul.mubr.bf16.gmra.mrb[0].mxu0 %v1179
    %v1215 = vpop.f32.mrb[0].mxu0
    %v1216 = vadd.f32 %v1177, %v1215
    %v1217 = vpop.f32.mrb[0].mxu0
    %v1218 = vpop.f32.mrb[0].mxu0
    %v1219 = vadd.f32 %v1177, %v1218
    %v1220 = vpop.f32.mrb[0].mxu0
    %1221 = vdwg.mxu0
    %v1222 = vmax.f32 %v1216, 0.0
    %v1223 = vmax.f32 %v1219, 0.0
    %v1224 = vpack.c.bf16 %v1223, %v1222
    %v1225 = vlaneseq
    %v1226 = vshrl.u32 %v1225, 7
    %v1227 = vsub.s32 0, %v1226
    %v1228 = vrot.slane %v86, %v1227
    %v1230 = vsel %vm179, %v1224, 0
    %1232 = vmatprep.subr.bf16.mxu0 0
    %1233 = vmatpush1.bf16.msra.mxu0 %v85
    %1234 = vmatprep.subr.bf16.mxu0 0
    %1235 = vmatpush1.bf16.msra.mxu0 0
    %1236 = vmatprep.subr.bf16.mxu0 0
    %1237 = vmatpush1.bf16.msra.mxu0 0
    %1238 = vmatprep.subr.bf16.mxu0 0
    %1239 = vmatpush1.bf16.msra.mxu0 0
    %1240 = vmatprep.subr.bf16.mxu0 0
    %1241 = vmatpush1.bf16.msra.mxu0 0
    %1242 = vmatprep.subr.bf16.mxu0 0
    %1243 = vmatpush1.bf16.msra.mxu0 0
    %1244 = vmatprep.subr.bf16.mxu0 0
    %1245 = vmatpush1.bf16.msra.mxu0 0
    %1246 = vmatprep.subr.bf16.mxu0 0
    %1247 = vmatpush1.bf16.msra.mxu0 0
    %1248 = vmatprep.subr.bf16.mxu0 0
    %1249 = vmatpush1.bf16.msra.mxu0 0
    %1250 = vmatprep.subr.bf16.mxu0 0
    %1251 = vmatpush1.bf16.msra.mxu0 0
    %1252 = vmatprep.subr.bf16.mxu0 0
    %1253 = vmatpush1.bf16.msra.mxu0 0
    %1254 = vmatprep.subr.bf16.mxu0 0
    %1255 = vmatpush1.bf16.msra.mxu0 0
    %1256 = vmatprep.subr.bf16.mxu0 0
    %1257 = vmatpush1.bf16.msra.mxu0 0
    %1258 = vmatprep.subr.bf16.mxu0 0
    %1259 = vmatpush1.bf16.msra.mxu0 0
    %1260 = vmatprep.subr.bf16.mxu0 0
    %1261 = vmatpush1.bf16.msra.mxu0 0
    %1262 = vmatprep.subr.bf16.mxu0 0
    %1263 = vmatpush1.bf16.msra.mxu0 0
    %1264 = vmatprep.mubr.bf16.mxu0 0
    %1265 = vmatmul.mubr.bf16.gmra.mrb[0].mxu0 %v1230
    %v1266 = vpop.f32.mrb[0].mxu0
    %v1267 = vadd.f32 %v1228, %v1266
    %v1268 = vpop.f32.mrb[0].mxu0
    %v1269 = vpop.f32.mrb[0].mxu0
    %v1270 = vadd.f32 %v1228, %v1269
    %v1271 = vpop.f32.mrb[0].mxu0
    %1272 = vdwg.mxu0
    %v1273 = vmul.f32 %v1267, -0.5
    %v1274 = vmul.f32 %v1270, -0.5
    %v1275 = vmul.f32 %v1273, 1.442695
    %v1276 = vpow.pop %v1275
    %v1277 = vmul.f32 %v1274, 1.442695
    %v1278 = vpow.pop %v1277
    %v1279 = vsub.f32 %v1169, %v1267
    %v1280 = vsub.f32 %v1170, %v1270
    %1283 = vrot.lane.b32.xlu0 %v1276, 120
    %v1284 = vpop.permute.xlu0 %1283
    %1285 = vrot.lane.b32.xlu0 %v1278, 120
    %v1286 = vpop.permute.xlu0 %1285
    %v1289 = vmul.f32 %v1279, %v1284
    %v1290 = vmul.f32 %v1280, %v1286
    %v1291 = vmul.f32 %v1289, %v1289
    %v1292 = vmul.f32 %v1290, %v1290
    %1295 = vrot.lane.b32.xlu0 %v1267, 120
    %v1296 = vpop.permute.xlu0 %1295
    %1297 = vrot.lane.b32.xlu0 %v1270, 120
    %v1298 = vpop.permute.xlu0 %1297
    %v1301 = vadd.f32 %v1291, %v1296
    %v1302 = vadd.f32 %v1292, %v1298
    %v1303 = vadd.f32 %v1301, 1.837877
    %v1304 = vadd.f32 %v1302, 1.837877
    %v1305 = vmul.f32 %v1303, %v1171
    %v1306 = vmul.f32 %v1304, %v1172
    %v1307 = vmul.f32 %v1305, 0.5
    %v1308 = vmul.f32 %v1306, 0.5
    %v1309 = vsel %vm125, %v1307, 0.0
    %v1310 = vsel %vm125, %v1308, 0.0
    %v1311 = vadd.f32 %v1309, %v1310
    %1312 = vadd.xlane.f32.xlu0 %v1311
    %v1313 = vpop.xlane.xlu0 %1312
    %v1314 = vrot.slane %v1313, 4
    %v1315 = vadd.f32 %v1313, %v1314
    %v1316 = vrot.slane %v1315, 2
    %v1317 = vadd.f32 %v1315, %v1316
    %v1318 = vrot.slane %v1317, 1
    %v1319 = vadd.f32 %v1317, %v1318
    %s1320 = vtos %v1319
    %1321 = vrot.lane.b32.xlu0 %v1267, 8
    %v1322 = vpop.permute.xlu0 %1321
    %1323 = vrot.lane.b32.xlu0 %v1270, 8
    %v1324 = vpop.permute.xlu0 %1323
    %1329 = vrot.lane.b32.xlu0 %v1289, 24
    %v1330 = vpop.permute.xlu0 %1329
    %1331 = vrot.lane.b32.xlu0 %v1290, 24
    %v1332 = vpop.permute.xlu0 %1331
    %v1335 = vsel %vm125, %v1169, %v1322
    %v1336 = vsel %vm125, %v1170, %v1324
    %v1337 = vsel %vm179, %v1335, %v1322
    %v1338 = vsel %vm179, %v1336, %v1324
    %vm1339 = vcmask 195584
    %v1340 = vsel %vm1339, %v1337, %v1330
    %v1341 = vsel %vm1339, %v1338, %v1332
    %v1342 = vpack.c.bf16 %v1341, %v1340
    %v1343 = vlaneseq
    %v1344 = vshrl.u32 %v1343, 7
    %v1345 = vsub.s32 0, %v1344
    %v1346 = vrot.slane %v93, %v1345
    %v1348 = vsel %vm232, %v1342, 0
    %1350 = vmatprep.subr.bf16.mxu0 0
    %1351 = vmatpush1.bf16.msra.mxu0 %v91
    %1352 = vmatprep.subr.bf16.mxu0 0
    %1353 = vmatpush1.bf16.msra.mxu0 %v92
    %1354 = vmatprep.subr.bf16.mxu0 0
    %1355 = vmatpush1.bf16.msra.mxu0 0
    %1356 = vmatprep.subr.bf16.mxu0 0
    %1357 = vmatpush1.bf16.msra.mxu0 0
    %1358 = vmatprep.subr.bf16.mxu0 0
    %1359 = vmatpush1.bf16.msra.mxu0 0
    %1360 = vmatprep.subr.bf16.mxu0 0
    %1361 = vmatpush1.bf16.msra.mxu0 0
    %1362 = vmatprep.subr.bf16.mxu0 0
    %1363 = vmatpush1.bf16.msra.mxu0 0
    %1364 = vmatprep.subr.bf16.mxu0 0
    %1365 = vmatpush1.bf16.msra.mxu0 0
    %1366 = vmatprep.subr.bf16.mxu0 0
    %1367 = vmatpush1.bf16.msra.mxu0 0
    %1368 = vmatprep.subr.bf16.mxu0 0
    %1369 = vmatpush1.bf16.msra.mxu0 0
    %1370 = vmatprep.subr.bf16.mxu0 0
    %1371 = vmatpush1.bf16.msra.mxu0 0
    %1372 = vmatprep.subr.bf16.mxu0 0
    %1373 = vmatpush1.bf16.msra.mxu0 0
    %1374 = vmatprep.subr.bf16.mxu0 0
    %1375 = vmatpush1.bf16.msra.mxu0 0
    %1376 = vmatprep.subr.bf16.mxu0 0
    %1377 = vmatpush1.bf16.msra.mxu0 0
    %1378 = vmatprep.subr.bf16.mxu0 0
    %1379 = vmatpush1.bf16.msra.mxu0 0
    %1380 = vmatprep.subr.bf16.mxu0 0
    %1381 = vmatpush1.bf16.msra.mxu0 0
    %1382 = vmatprep.mubr.bf16.mxu0 0
    %1383 = vmatmul.mubr.bf16.gmra.mrb[0].mxu0 %v1348
    %v1384 = vpop.f32.mrb[0].mxu0
    %v1385 = vadd.f32 %v1346, %v1384
    %v1386 = vpop.f32.mrb[0].mxu0
    %v1387 = vpop.f32.mrb[0].mxu0
    %v1388 = vadd.f32 %v1346, %v1387
    %v1389 = vpop.f32.mrb[0].mxu0
    %1390 = vdwg.mxu0
    %v1391 = vmax.f32 %v1385, 0.0
    %v1392 = vmax.f32 %v1388, 0.0
    %v1393 = vld [vmem:[%s3] sm:$0xff]
    %v1394 = vld [vmem:[%s3 + $0x8] sm:$0xff]
    %v1395 = vmul.f32 %v1391, %v1393
    %v1396 = vmul.f32 %v1392, %v1394
    %v1397 = vpack.c.bf16 %v1396, %v1395
    %v1398 = vlaneseq
    %v1399 = vshrl.u32 %v1398, 7
    %v1400 = vsub.s32 0, %v1399
    %v1401 = vrot.slane %v100, %v1400
    %v1403 = vsel %vm232, %v1397, 0
    %1405 = vmatprep.subr.bf16.mxu0 0
    %1406 = vmatpush1.bf16.msra.mxu0 %v98
    %1407 = vmatprep.subr.bf16.mxu0 0
    %1408 = vmatpush1.bf16.msra.mxu0 %v99
    %1409 = vmatprep.subr.bf16.mxu0 0
    %1410 = vmatpush1.bf16.msra.mxu0 0
    %1411 = vmatprep.subr.bf16.mxu0 0
    %1412 = vmatpush1.bf16.msra.mxu0 0
    %1413 = vmatprep.subr.bf16.mxu0 0
    %1414 = vmatpush1.bf16.msra.mxu0 0
    %1415 = vmatprep.subr.bf16.mxu0 0
    %1416 = vmatpush1.bf16.msra.mxu0 0
    %1417 = vmatprep.subr.bf16.mxu0 0
    %1418 = vmatpush1.bf16.msra.mxu0 0
    %1419 = vmatprep.subr.bf16.mxu0 0
    %1420 = vmatpush1.bf16.msra.mxu0 0
    %1421 = vmatprep.subr.bf16.mxu0 0
    %1422 = vmatpush1.bf16.msra.mxu0 0
    %1423 = vmatprep.subr.bf16.mxu0 0
    %1424 = vmatpush1.bf16.msra.mxu0 0
    %1425 = vmatprep.subr.bf16.mxu0 0
    %1426 = vmatpush1.bf16.msra.mxu0 0
    %1427 = vmatprep.subr.bf16.mxu0 0
    %1428 = vmatpush1.bf16.msra.mxu0 0
    %1429 = vmatprep.subr.bf16.mxu0 0
    %1430 = vmatpush1.bf16.msra.mxu0 0
    %1431 = vmatprep.subr.bf16.mxu0 0
    %1432 = vmatpush1.bf16.msra.mxu0 0
    %1433 = vmatprep.subr.bf16.mxu0 0
    %1434 = vmatpush1.bf16.msra.mxu0 0
    %1435 = vmatprep.subr.bf16.mxu0 0
    %1436 = vmatpush1.bf16.msra.mxu0 0
    %1437 = vmatprep.mubr.bf16.mxu0 0
    %1438 = vmatmul.mubr.bf16.gmra.mrb[0].mxu0 %v1403
    %v1439 = vpop.f32.mrb[0].mxu0
    %v1440 = vadd.f32 %v1401, %v1439
    %v1441 = vpop.f32.mrb[0].mxu0
    %v1442 = vpop.f32.mrb[0].mxu0
    %v1443 = vadd.f32 %v1401, %v1442
    %v1444 = vpop.f32.mrb[0].mxu0
    %1445 = vdwg.mxu0
    %v1446 = vlaneseq
    %v1447 = vshrl.u32 %v1446, 7
    %v1448 = vsub.s32 0, %v1447
    %v1449 = vrot.slane %v107, %v1448
    %1450 = vmatprep.subr.bf16.mxu0 0
    %1451 = vmatpush1.bf16.msra.mxu0 %v105
    %1452 = vmatprep.subr.bf16.mxu0 0
    %1453 = vmatpush1.bf16.msra.mxu0 %v106
    %1454 = vmatprep.subr.bf16.mxu0 0
    %1455 = vmatpush1.bf16.msra.mxu0 0
    %1456 = vmatprep.subr.bf16.mxu0 0
    %1457 = vmatpush1.bf16.msra.mxu0 0
    %1458 = vmatprep.subr.bf16.mxu0 0
    %1459 = vmatpush1.bf16.msra.mxu0 0
    %1460 = vmatprep.subr.bf16.mxu0 0
    %1461 = vmatpush1.bf16.msra.mxu0 0
    %1462 = vmatprep.subr.bf16.mxu0 0
    %1463 = vmatpush1.bf16.msra.mxu0 0
    %1464 = vmatprep.subr.bf16.mxu0 0
    %1465 = vmatpush1.bf16.msra.mxu0 0
    %1466 = vmatprep.subr.bf16.mxu0 0
    %1467 = vmatpush1.bf16.msra.mxu0 0
    %1468 = vmatprep.subr.bf16.mxu0 0
    %1469 = vmatpush1.bf16.msra.mxu0 0
    %1470 = vmatprep.subr.bf16.mxu0 0
    %1471 = vmatpush1.bf16.msra.mxu0 0
    %1472 = vmatprep.subr.bf16.mxu0 0
    %1473 = vmatpush1.bf16.msra.mxu0 0
    %1474 = vmatprep.subr.bf16.mxu0 0
    %1475 = vmatpush1.bf16.msra.mxu0 0
    %1476 = vmatprep.subr.bf16.mxu0 0
    %1477 = vmatpush1.bf16.msra.mxu0 0
    %1478 = vmatprep.subr.bf16.mxu0 0
    %1479 = vmatpush1.bf16.msra.mxu0 0
    %1480 = vmatprep.subr.bf16.mxu0 0
    %1481 = vmatpush1.bf16.msra.mxu0 0
    %1482 = vmatprep.mubr.bf16.mxu0 0
    %1483 = vmatmul.mubr.bf16.gmra.mrb[0].mxu0 %v1179
    %v1484 = vpop.f32.mrb[0].mxu0
    %v1485 = vadd.f32 %v1449, %v1484
    %v1486 = vpop.f32.mrb[0].mxu0
    %v1487 = vpop.f32.mrb[0].mxu0
    %v1488 = vadd.f32 %v1449, %v1487
    %v1489 = vpop.f32.mrb[0].mxu0
    %1490 = vdwg.mxu0
    %v1491 = vadd.f32 %v1440, %v1485
    %v1492 = vadd.f32 %v1443, %v1488
    %v1493 = vxor.u32 %v1491, 2147483648
    %v1494 = vxor.u32 %v1492, 2147483648
    %v1495 = vmul.f32 %v1493, 1.442695
    %v1496 = vpow.pop %v1495
    %v1497 = vmul.f32 %v1494, 1.442695
    %v1498 = vpow.pop %v1497
    %v1499 = vadd.f32 %v1496, 1.0
    %v1500 = vadd.f32 %v1498, 1.0
    %v1501 = vrcp.pop %v1499
    %v1502 = vmul.f32 1.0, %v1501
    %v1503 = vrcp.pop %v1500
    %v1504 = vmul.f32 1.0, %v1503
    %1507 = vrot.lane.b32.xlu0 %v1485, 64
    %v1508 = vpop.permute.xlu0 %1507
    %1509 = vrot.lane.b32.xlu0 %v1488, 64
    %v1510 = vpop.permute.xlu0 %1509
    %v1513 = vmul.f32 %v1502, %v1508
    %v1514 = vmul.f32 %v1504, %v1510
    %1517 = vrot.lane.b32.xlu0 %v1513, 64
    %v1518 = vpop.permute.xlu0 %1517
    %1519 = vrot.lane.b32.xlu0 %v1514, 64
    %v1520 = vpop.permute.xlu0 %1519
    %v1523 = vadd.f32 %v1440, %v1518
    %v1524 = vadd.f32 %v1443, %v1520
    %v1525 = vtanh.pop %v1523
    %v1526 = vtanh.pop %v1524
    %v1527 = vsub.f32 1.0, %v1502
    %v1528 = vsub.f32 1.0, %v1504
    %1531 = vrot.lane.b32.xlu0 %v1525, 96
    %v1532 = vpop.permute.xlu0 %1531
    %1533 = vrot.lane.b32.xlu0 %v1526, 96
    %v1534 = vpop.permute.xlu0 %1533
    %v1537 = vmul.f32 %v1527, %v1532
    %v1538 = vmul.f32 %v1528, %v1534
    %1541 = vrot.lane.b32.xlu0 %v1161, 32
    %v1542 = vpop.permute.xlu0 %1541
    %1543 = vrot.lane.b32.xlu0 %v1166, 32
    %v1544 = vpop.permute.xlu0 %1543
    %v1547 = vmul.f32 %v1502, %v1542
    %v1548 = vmul.f32 %v1504, %v1544
    %v1549 = vadd.f32 %v1537, %v1547
    %v1550 = vadd.f32 %v1538, %v1548
    %v1551 = vpack.c.bf16 %v1550, %v1549
    %1553 = vrot.lane.b32.xlu0 %v1551, 96
    %v1554 = vpop.permute.xlu0 %1553
    %v1556 = vsel %vm232, %v1554, 0
    %1558 = vmatprep.subr.bf16.mxu0 0
    %1559 = vmatpush1.bf16.msra.mxu0 %v80
    %1560 = vmatprep.subr.bf16.mxu0 0
    %1561 = vmatpush1.bf16.msra.mxu0 %v81
    %1562 = vmatprep.subr.bf16.mxu0 0
    %1563 = vmatpush1.bf16.msra.mxu0 0
    %1564 = vmatprep.subr.bf16.mxu0 0
    %1565 = vmatpush1.bf16.msra.mxu0 0
    %1566 = vmatprep.subr.bf16.mxu0 0
    %1567 = vmatpush1.bf16.msra.mxu0 0
    %1568 = vmatprep.subr.bf16.mxu0 0
    %1569 = vmatpush1.bf16.msra.mxu0 0
    %1570 = vmatprep.subr.bf16.mxu0 0
    %1571 = vmatpush1.bf16.msra.mxu0 0
    %1572 = vmatprep.subr.bf16.mxu0 0
    %1573 = vmatpush1.bf16.msra.mxu0 0
    %1574 = vmatprep.subr.bf16.mxu0 0
    %1575 = vmatpush1.bf16.msra.mxu0 0
    %1576 = vmatprep.subr.bf16.mxu0 0
    %1577 = vmatpush1.bf16.msra.mxu0 0
    %1578 = vmatprep.subr.bf16.mxu0 0
    %1579 = vmatpush1.bf16.msra.mxu0 0
    %1580 = vmatprep.subr.bf16.mxu0 0
    %1581 = vmatpush1.bf16.msra.mxu0 0
    %1582 = vmatprep.subr.bf16.mxu0 0
    %1583 = vmatpush1.bf16.msra.mxu0 0
    %1584 = vmatprep.subr.bf16.mxu0 0
    %1585 = vmatpush1.bf16.msra.mxu0 0
    %1586 = vmatprep.subr.bf16.mxu0 0
    %1587 = vmatpush1.bf16.msra.mxu0 0
    %1588 = vmatprep.subr.bf16.mxu0 0
    %1589 = vmatpush1.bf16.msra.mxu0 0
    %1590 = vmatprep.mubr.bf16.mxu0 0
    %1591 = vmatmul.mubr.bf16.gmra.mrb[0].mxu0 %v1556
    %v1592 = vpop.f32.mrb[0].mxu0
    %v1593 = vadd.f32 %v1177, %v1592
    %v1594 = vpop.f32.mrb[0].mxu0
    %v1595 = vpop.f32.mrb[0].mxu0
    %v1596 = vadd.f32 %v1177, %v1595
    %v1597 = vpop.f32.mrb[0].mxu0
    %1598 = vdwg.mxu0
    %v1599 = vmax.f32 %v1593, 0.0
    %v1600 = vmax.f32 %v1596, 0.0
    %v1601 = vpack.c.bf16 %v1600, %v1599
    %v1603 = vsel %vm179, %v1601, 0
    %1605 = vmatprep.subr.bf16.mxu0 0
    %1606 = vmatpush1.bf16.msra.mxu0 %v85
    %1607 = vmatprep.subr.bf16.mxu0 0
    %1608 = vmatpush1.bf16.msra.mxu0 0
    %1609 = vmatprep.subr.bf16.mxu0 0
    %1610 = vmatpush1.bf16.msra.mxu0 0
    %1611 = vmatprep.subr.bf16.mxu0 0
    %1612 = vmatpush1.bf16.msra.mxu0 0
    %1613 = vmatprep.subr.bf16.mxu0 0
    %1614 = vmatpush1.bf16.msra.mxu0 0
    %1615 = vmatprep.subr.bf16.mxu0 0
    %1616 = vmatpush1.bf16.msra.mxu0 0
    %1617 = vmatprep.subr.bf16.mxu0 0
    %1618 = vmatpush1.bf16.msra.mxu0 0
    %1619 = vmatprep.subr.bf16.mxu0 0
    %1620 = vmatpush1.bf16.msra.mxu0 0
    %1621 = vmatprep.subr.bf16.mxu0 0
    %1622 = vmatpush1.bf16.msra.mxu0 0
    %1623 = vmatprep.subr.bf16.mxu0 0
    %1624 = vmatpush1.bf16.msra.mxu0 0
    %1625 = vmatprep.subr.bf16.mxu0 0
    %1626 = vmatpush1.bf16.msra.mxu0 0
    %1627 = vmatprep.subr.bf16.mxu0 0
    %1628 = vmatpush1.bf16.msra.mxu0 0
    %1629 = vmatprep.subr.bf16.mxu0 0
    %1630 = vmatpush1.bf16.msra.mxu0 0
    %1631 = vmatprep.subr.bf16.mxu0 0
    %1632 = vmatpush1.bf16.msra.mxu0 0
    %1633 = vmatprep.subr.bf16.mxu0 0
    %1634 = vmatpush1.bf16.msra.mxu0 0
    %1635 = vmatprep.subr.bf16.mxu0 0
    %1636 = vmatpush1.bf16.msra.mxu0 0
    %1637 = vmatprep.mubr.bf16.mxu0 0
    %1638 = vmatmul.mubr.bf16.gmra.mrb[0].mxu0 %v1603
    %v1639 = vpop.f32.mrb[0].mxu0
    %v1640 = vadd.f32 %v1228, %v1639
    %v1641 = vpop.f32.mrb[0].mxu0
    %v1642 = vpop.f32.mrb[0].mxu0
    %v1643 = vadd.f32 %v1228, %v1642
    %v1644 = vpop.f32.mrb[0].mxu0
    %1645 = vdwg.mxu0
    %v1646 = vmul.f32 %v1640, 0.5
    %v1647 = vmul.f32 %v1643, 0.5
    %v1648 = vsub.f32 -4.6051702, %v1646
    %v1649 = vsub.f32 -4.6051702, %v1647
    %v1650 = vmul.f32 %v1640, 1.442695
    %v1651 = vpow.pop %v1650
    %v1652 = vmul.f32 %v1643, 1.442695
    %v1653 = vpow.pop %v1652
    %v1654 = vsub.f32 %v1640, %v1169
    %v1655 = vsub.f32 %v1643, %v1170
    %v1656 = vmul.f32 %v1654, %v1654
    %v1657 = vmul.f32 %v1655, %v1655
    %1660 = vrot.lane.b32.xlu0 %v1656, 8
    %v1661 = vpop.permute.xlu0 %1660
    %1662 = vrot.lane.b32.xlu0 %v1657, 8
    %v1663 = vpop.permute.xlu0 %1662
    %v1666 = vadd.f32 %v1651, %v1661
    %v1667 = vadd.f32 %v1653, %v1663
    %v1668 = vmul.f32 %v1666, 5000.0
    %v1669 = vmul.f32 %v1667, 5000.0
    %v1670 = vadd.f32 %v1648, %v1668
    %v1671 = vadd.f32 %v1649, %v1669
    %v1672 = vsub.f32 %v1670, 0.5
    %v1673 = vsub.f32 %v1671, 0.5
    %1676 = vrot.lane.b32.xlu0 %v1171, 8
    %v1677 = vpop.permute.xlu0 %1676
    %1678 = vrot.lane.b32.xlu0 %v1172, 8
    %v1679 = vpop.permute.xlu0 %1678
    %v1682 = vmul.f32 %v1672, %v1677
    %v1683 = vmul.f32 %v1673, %v1679
    %1686 = vrot.lane.b32.xlu0 %v1682, 120
    %v1687 = vpop.permute.xlu0 %1686
    %1688 = vrot.lane.b32.xlu0 %v1683, 120
    %v1689 = vpop.permute.xlu0 %1688
    %v1692 = vsel %vm125, %v1687, 0.0
    %v1693 = vsel %vm125, %v1689, 0.0
    %v1694 = vadd.f32 %v1692, %v1693
    %1695 = vadd.xlane.f32.xlu0 %v1694
    %v1696 = vpop.xlane.xlu0 %1695
    %v1697 = vrot.slane %v1696, 4
    %v1698 = vadd.f32 %v1696, %v1697
    %v1699 = vrot.slane %v1698, 2
    %v1700 = vadd.f32 %v1698, %v1699
    %v1701 = vrot.slane %v1700, 1
    %v1702 = vadd.f32 %v1700, %v1701
    %s1703 = vtos %v1702
    %v1704 = vld [vmem:[%s7] sm:$0xff]
    %v1705 = vsub.f32 %v1549, %v1542
    %v1706 = vsub.f32 %v1550, %v1544
    %1709 = vrot.lane.b32.xlu0 %v1705, 96
    %v1710 = vpop.permute.xlu0 %1709
    %1711 = vrot.lane.b32.xlu0 %v1706, 96
    %v1712 = vpop.permute.xlu0 %1711
    %v1716 = vsel %vm179, %v1704, 0
    %1718 = vmatprep.subr.mxu0 0.0
    %1719 = vmatpush1.msra.mxu0 %v1710
    %1720 = vmatprep.subr.mxu0 0.0
    %1721 = vmatpush1.msra.mxu0 %v1712
    %1722 = vmatprep.subr.mxu0 0.0
    %1723 = vmatpush1.msra.mxu0 0.0
    %1724 = vmatprep.subr.mxu0 0.0
    %1725 = vmatpush1.msra.mxu0 0.0
    %1726 = vmatprep.subr.mxu0 0.0
    %1727 = vmatpush1.msra.mxu0 0.0
    %1728 = vmatprep.subr.mxu0 0.0
    %1729 = vmatpush1.msra.mxu0 0.0
    %1730 = vmatprep.subr.mxu0 0.0
    %1731 = vmatpush1.msra.mxu0 0.0
    %1732 = vmatprep.subr.mxu0 0.0
    %1733 = vmatpush1.msra.mxu0 0.0
    %1734 = vmatprep.subr.mxu0 0.0
    %1735 = vmatpush1.msra.mxu0 0.0
    %1736 = vmatprep.subr.mxu0 0.0
    %1737 = vmatpush1.msra.mxu0 0.0
    %1738 = vmatprep.subr.mxu0 0.0
    %1739 = vmatpush1.msra.mxu0 0.0
    %1740 = vmatprep.subr.mxu0 0.0
    %1741 = vmatpush1.msra.mxu0 0.0
    %1742 = vmatprep.subr.mxu0 0.0
    %1743 = vmatpush1.msra.mxu0 0.0
    %1744 = vmatprep.subr.mxu0 0.0
    %1745 = vmatpush1.msra.mxu0 0.0
    %1746 = vmatprep.subr.mxu0 0.0
    %1747 = vmatpush1.msra.mxu0 0.0
    %1748 = vmatprep.subr.mxu0 0.0
    %1749 = vmatpush1.msra.mxu0 0.0
    %1750 = vmatprep.subr.mxu0 0.0
    %1751 = vmatpush1.msra.mxu0 0.0
    %1752 = vmatprep.subr.mxu0 0.0
    %1753 = vmatpush1.msra.mxu0 0.0
    %1754 = vmatprep.subr.mxu0 0.0
    %1755 = vmatpush1.msra.mxu0 0.0
    %1756 = vmatprep.subr.mxu0 0.0
    %1757 = vmatpush1.msra.mxu0 0.0
    %1758 = vmatprep.subr.mxu0 0.0
    %1759 = vmatpush1.msra.mxu0 0.0
    %1760 = vmatprep.subr.mxu0 0.0
    %1761 = vmatpush1.msra.mxu0 0.0
    %1762 = vmatprep.subr.mxu0 0.0
    %1763 = vmatpush1.msra.mxu0 0.0
    %1764 = vmatprep.subr.mxu0 0.0
    %1765 = vmatpush1.msra.mxu0 0.0
    %1766 = vmatprep.subr.mxu0 0.0
    %1767 = vmatpush1.msra.mxu0 0.0
    %1768 = vmatprep.subr.mxu0 0.0
    %1769 = vmatpush1.msra.mxu0 0.0
    %1770 = vmatprep.subr.mxu0 0.0
    %1771 = vmatpush1.msra.mxu0 0.0
    %1772 = vmatprep.subr.mxu0 0.0
    %1773 = vmatpush1.msra.mxu0 0.0
    %1774 = vmatprep.subr.mxu0 0.0
    %1775 = vmatpush1.msra.mxu0 0.0
    %1776 = vmatprep.subr.mxu0 0.0
    %1777 = vmatpush1.msra.mxu0 0.0
    %1778 = vmatprep.subr.mxu0 0.0
    %1779 = vmatpush1.msra.mxu0 0.0
    %1780 = vmatprep.subr.mxu0 0.0
    %1781 = vmatpush1.msra.mxu0 0.0
    %1782 = vmatprep.mubr.f32.mxu0 0.0
    %1783 = vmatmul.mubr.f32.gmra.mrb[0].mxu0 %v1716
    %v1784 = vpop.f32.mrb[0].mxu0
    %v1785 = vadd.f32 0.0, %v1784
    %v1786 = vpop.f32.mrb[0].mxu0
    %1787 = vdwg.mxu0
    %v1788 = vmul.f32 %v1785, 2.0
    %v1789 = vadd.f32 %v1077, %v1788
    %1790 = vst.msk [vmem:[#allocation7] sm:$0xff] %vm232, %v1789
    %1792 = vrot.lane.b32.xlu0 %v1789, 32
    %v1793 = vpop.permute.xlu0 %1792
    %v1795 = vpack.c.bf16 %v1793, %v1793
    %v1796 = vlaneseq
    %v1797 = vshrl.u32 %v1796, 7
    %v1798 = vsub.s32 0, %v1797
    %v1799 = vrot.slane %v114, %v1798
    %1801 = vrot.lane.b32.xlu0 %v1795, 96
    %v1802 = vpop.permute.xlu0 %1801
    %v1804 = vsel %vm232, %v1802, 0
    %1806 = vmatprep.subr.bf16.mxu0 0
    %1807 = vmatpush1.bf16.msra.mxu0 %v112
    %1808 = vmatprep.subr.bf16.mxu0 0
    %1809 = vmatpush1.bf16.msra.mxu0 %v113
    %1810 = vmatprep.subr.bf16.mxu0 0
    %1811 = vmatpush1.bf16.msra.mxu0 0
    %1812 = vmatprep.subr.bf16.mxu0 0
    %1813 = vmatpush1.bf16.msra.mxu0 0
    %1814 = vmatprep.subr.bf16.mxu0 0
    %1815 = vmatpush1.bf16.msra.mxu0 0
    %1816 = vmatprep.subr.bf16.mxu0 0
    %1817 = vmatpush1.bf16.msra.mxu0 0
    %1818 = vmatprep.subr.bf16.mxu0 0
    %1819 = vmatpush1.bf16.msra.mxu0 0
    %1820 = vmatprep.subr.bf16.mxu0 0
    %1821 = vmatpush1.bf16.msra.mxu0 0
    %1822 = vmatprep.subr.bf16.mxu0 0
    %1823 = vmatpush1.bf16.msra.mxu0 0
    %1824 = vmatprep.subr.bf16.mxu0 0
    %1825 = vmatpush1.bf16.msra.mxu0 0
    %1826 = vmatprep.subr.bf16.mxu0 0
    %1827 = vmatpush1.bf16.msra.mxu0 0
    %1828 = vmatprep.subr.bf16.mxu0 0
    %1829 = vmatpush1.bf16.msra.mxu0 0
    %1830 = vmatprep.subr.bf16.mxu0 0
    %1831 = vmatpush1.bf16.msra.mxu0 0
    %1832 = vmatprep.subr.bf16.mxu0 0
    %1833 = vmatpush1.bf16.msra.mxu0 0
    %1834 = vmatprep.subr.bf16.mxu0 0
    %1835 = vmatpush1.bf16.msra.mxu0 0
    %1836 = vmatprep.subr.bf16.mxu0 0
    %1837 = vmatpush1.bf16.msra.mxu0 0
    %1838 = vmatprep.mubr.bf16.mxu0 0
    %1839 = vmatmul.mubr.bf16.gmra.mrb[0].mxu0 %v1556
    %v1840 = vpop.f32.mrb[0].mxu0
    %v1841 = vadd.f32 %v1799, %v1840
    %v1842 = vpop.f32.mrb[0].mxu0
    %v1843 = vpop.f32.mrb[0].mxu0
    %v1844 = vadd.f32 %v1799, %v1843
    %v1845 = vpop.f32.mrb[0].mxu0
    %1846 = vmatprep.mubr.bf16.mxu0 0
    %1847 = vmatmul.mubr.bf16.gmra.mrb[0].mxu0 %v1804
    %v1848 = vpop.f32.mrb[0].mxu0
    %v1849 = vadd.f32 %v1799, %v1848
    %v1850 = vpop.f32.mrb[0].mxu0
    %v1851 = vpop.f32.mrb[0].mxu0
    %v1852 = vpop.f32.mrb[0].mxu0
    %1853 = vdwg.mxu0
    %v1854 = vmax.f32 %v1841, 0.0
    %v1855 = vmax.f32 %v1844, 0.0
    %v1856 = vmax.f32 %v1849, 0.0
    %v1857 = vpack.c.bf16 %v1855, %v1854
    %v1858 = vpack.c.bf16 %v1856, %v1856
    %v1859 = vlaneseq
    %v1860 = vshrl.u32 %v1859, 7
    %v1861 = vsub.s32 0, %v1860
    %v1862 = vrot.slane %v118, %v1861
    %v1864 = vsel %vm179, %v1857, 0
    %v1867 = vsel %vm179, %v1858, 0
    %1869 = vmatprep.subr.bf16.mxu0 0
    %1870 = vmatpush1.bf16.msra.mxu0 %v117
    %1871 = vmatprep.subr.bf16.mxu0 0
    %1872 = vmatpush1.bf16.msra.mxu0 0
    %1873 = vmatprep.subr.bf16.mxu0 0
    %1874 = vmatpush1.bf16.msra.mxu0 0
    %1875 = vmatprep.subr.bf16.mxu0 0
    %1876 = vmatpush1.bf16.msra.mxu0 0
    %1877 = vmatprep.subr.bf16.mxu0 0
    %1878 = vmatpush1.bf16.msra.mxu0 0
    %1879 = vmatprep.subr.bf16.mxu0 0
    %1880 = vmatpush1.bf16.msra.mxu0 0
    %1881 = vmatprep.subr.bf16.mxu0 0
    %1882 = vmatpush1.bf16.msra.mxu0 0
    %1883 = vmatprep.subr.bf16.mxu0 0
    %1884 = vmatpush1.bf16.msra.mxu0 0
    %1885 = vmatprep.subr.bf16.mxu0 0
    %1886 = vmatpush1.bf16.msra.mxu0 0
    %1887 = vmatprep.subr.bf16.mxu0 0
    %1888 = vmatpush1.bf16.msra.mxu0 0
    %1889 = vmatprep.subr.bf16.mxu0 0
    %1890 = vmatpush1.bf16.msra.mxu0 0
    %1891 = vmatprep.subr.bf16.mxu0 0
    %1892 = vmatpush1.bf16.msra.mxu0 0
    %1893 = vmatprep.subr.bf16.mxu0 0
    %1894 = vmatpush1.bf16.msra.mxu0 0
    %1895 = vmatprep.subr.bf16.mxu0 0
    %1896 = vmatpush1.bf16.msra.mxu0 0
    %1897 = vmatprep.subr.bf16.mxu0 0
    %1898 = vmatpush1.bf16.msra.mxu0 0
    %1899 = vmatprep.subr.bf16.mxu0 0
    %1900 = vmatpush1.bf16.msra.mxu0 0
    %1901 = vmatprep.mubr.bf16.mxu0 0
    %1902 = vmatmul.mubr.bf16.gmra.mrb[0].mxu0 %v1864
    %v1903 = vpop.f32.mrb[0].mxu0
    %v1904 = vadd.f32 %v1862, %v1903
    %v1905 = vpop.f32.mrb[0].mxu0
    %v1906 = vpop.f32.mrb[0].mxu0
    %v1907 = vadd.f32 %v1862, %v1906
    %v1908 = vpop.f32.mrb[0].mxu0
    %1909 = vmatprep.mubr.bf16.mxu0 0
    %1910 = vmatmul.mubr.bf16.gmra.mrb[0].mxu0 %v1867
    %v1911 = vpop.f32.mrb[0].mxu0
    %v1912 = vadd.f32 %v1862, %v1911
    %v1913 = vpop.f32.mrb[0].mxu0
    %v1914 = vpop.f32.mrb[0].mxu0
    %v1915 = vpop.f32.mrb[0].mxu0
    %1916 = vdwg.mxu0
    %vm1917 = vcmask 15360
    %1918 = vst.msk [vmem:[%s10] sm:$0xff] %vm1917, %v1912
    %v1919 = vld [vmem:[%s5] sm:$0xff]
    %v1920 = vld [vmem:[%s5 + $0x8] sm:$0xff]
    %v1921 = vmax.f32 %v1904, 0.0
    %v1922 = vmax.f32 %v1907, 0.0
    %v1923 = vmul.f32 %v1904, %v1919
    %v1924 = vmul.f32 %v1907, %v1920
    %v1925 = vsub.f32 %v1921, %v1923
    %v1926 = vsub.f32 %v1922, %v1924
    %v1927 = vand.u32 2147483647, %v1904
    %v1928 = vand.u32 2147483647, %v1907
    %v1929 = vsub.f32 0.0, %v1927
    %v1930 = vsub.f32 0.0, %v1928
    %v1931 = vmul.f32 %v1929, 1.442695
    %v1932 = vpow.pop %v1931
    %v1933 = vmul.f32 %v1930, 1.442695
    %v1934 = vpow.pop %v1933
    %v1935 = vadd.f32 %v1932, 1.0
    %v1936 = vlog2.pop %v1935
    %v1937 = vmul.f32 %v1936, 0.6931472
    %v1938 = vmul.f32 -0.5, %v1932
    %v1939 = vadd.f32 %v1938, 1.0
    %v1940 = vmul.f32 %v1939, %v1932
    %v1941 = vand.u32 2147483647, %v1932
    %vm1942 = vcmp.lt.f32.partialorder %v1941, 0.0004427343
    %v1943 = vsel %vm1942, %v1940, %v1937
    %v1944 = vadd.f32 %v1934, 1.0
    %v1945 = vlog2.pop %v1944
    %v1946 = vmul.f32 %v1945, 0.6931472
    %v1947 = vmul.f32 -0.5, %v1934
    %v1948 = vadd.f32 %v1947, 1.0
    %v1949 = vmul.f32 %v1948, %v1934
    %v1950 = vand.u32 2147483647, %v1934
    %vm1951 = vcmp.lt.f32.partialorder %v1950, 0.0004427343
    %v1952 = vsel %vm1951, %v1949, %v1946
    %v1953 = vadd.f32 %v1925, %v1943
    %v1954 = vadd.f32 %v1926, %v1952
    %v1955 = vsel %vm1917, %v1953, 0.0
    %v1956 = vsel %vm1917, %v1954, 0.0
    %v1957 = vadd.f32 %v1955, %v1956
    %1958 = vadd.xlane.f32.xlu0 %v1957
    %v1959 = vpop.xlane.xlu0 %1958
    %v1960 = vrot.slane %v1959, 4
    %v1961 = vadd.f32 %v1959, %v1960
    %v1962 = vrot.slane %v1961, 2
    %v1963 = vadd.f32 %v1961, %v1962
    %v1964 = vrot.slane %v1963, 1
    %v1965 = vadd.f32 %v1963, %v1964
    %s1966 = vtos %v1965
    %v1967 = vld [vmem:[%s4] sm:$0xff]
    %v1968 = vmax.f32 %v1912, 0.0
    %v1969 = vmul.f32 %v1912, %v1967
    %v1970 = vsub.f32 %v1968, %v1969
    %v1971 = vand.u32 2147483647, %v1912
    %v1972 = vsub.f32 0.0, %v1971
    %v1973 = vmul.f32 %v1972, 1.442695
    %v1974 = vpow.pop %v1973
    %v1975 = vadd.f32 %v1974, 1.0
    %v1976 = vlog2.pop %v1975
    %v1977 = vmul.f32 %v1976, 0.6931472
    %v1978 = vmul.f32 -0.5, %v1974
    %v1979 = vadd.f32 %v1978, 1.0
    %v1980 = vmul.f32 %v1979, %v1974
    %v1981 = vand.u32 2147483647, %v1974
    %vm1982 = vcmp.lt.f32.partialorder %v1981, 0.0004427343
    %v1983 = vsel %vm1982, %v1980, %v1977
    %v1984 = vadd.f32 %v1970, %v1983
    %v1985 = vsel %vm1917, %v1984, 0.0
    %1986 = vadd.xlane.f32.xlu0 %v1985
    %v1987 = vpop.xlane.xlu0 %1986
    %v1988 = vrot.slane %v1987, 4
    %v1989 = vadd.f32 %v1987, %v1988
    %v1990 = vrot.slane %v1989, 2
    %v1991 = vadd.f32 %v1989, %v1990
    %v1992 = vrot.slane %v1991, 1
    %v1993 = vadd.f32 %v1991, %v1992
    %s1994 = vtos %v1993
    %s1995 = sadd.f32 %s1966, %s1994
    %s1996 = sadd.f32 %s1320, %s1703
    %s1997 = sadd.f32 %s1996, %s1995
    %s1998 = scalar_lea.smem [#allocation8], 0
    %1999 = sst [smem:[%s1998]] %s1320
    %s2000 = scalar_lea.smem [#allocation8], 1
    %2001 = sst [smem:[%s2000]] %s1703
    %s2002 = scalar_lea.smem [#allocation8], 2
    %2003 = sst [smem:[%s2002]] %s1995
    %s2004 = scalar_lea.smem [#allocation8], 3
    %2005 = sst [smem:[%s2004]] %s1997
    // Predicated region
    $region42: #{fwd.1} parent=1 // pred_check
      _
    $region43: #{fwd.1} parent=1 // pred_check_branch
      %2007 = sbr.rel (0) target = $region45
    $region44: #{fwd.1} parent=1 // pred_region
      %s2009 = ssub.s32 128, 128
      %2010 = vsyncadd [#allocation5], %s2009
      %s2012 = sshll.u32 [#allocation7], 4
      %s2013 = int_to_ptr.vmem [resolvable:$true] %s2012
      %2015 = dma.vmem_to_hbm [thread:$0]  %s2013, 128, %s9, [#allocation5]
    $region45: #{fwd.1} parent=1 // pred_fallthru
      _
    // Predicated region
    $region46: #{fwd.1} parent=1 // pred_check
      _
    $region47: #{fwd.1} parent=1 // pred_check_branch
      %2017 = sbr.rel (0) target = $region49
    $region48: #{fwd.1} parent=1 // pred_region
      _
    $region49: #{fwd.1} parent=1 // pred_fallthru
      _
    // Predicated region
    $region50: #{fwd.1} parent=1 // pred_check
      _
    $region51: #{fwd.1} parent=1 // pred_check_branch
      %2019 = sbr.rel (0) target = $region53
    $region52: #{fwd.1} parent=1 // pred_region
      %s2021 = ssub.s32 16, 16
      %2022 = vsyncadd [#allocation6], %s2021
      %2025 = dma.smem_to_hbm [#allocation8], 16, %s11, [#allocation6]
    $region53: #{fwd.1} parent=1 // pred_fallthru
      _
    // Predicated region
    $region54: #{fwd.1} parent=1 // pred_check
      _
    $region55: #{fwd.1} parent=1 // pred_check_branch
      %2027 = sbr.rel (0) target = $region57
    $region56: #{fwd.1} parent=1 // pred_region
      %2028 = dma.done [#allocation5], 128
    $region57: #{fwd.1} parent=1 // pred_fallthru
      _
    // Predicated region
    $region58: #{fwd.1} parent=1 // pred_check
      _
    $region59: #{fwd.1} parent=1 // pred_check_branch
      %2030 = sbr.rel (0) target = $region61
    $region60: #{fwd.1} parent=1 // pred_region
      _
    $region61: #{fwd.1} parent=1 // pred_fallthru
      _
    // Predicated region
    $region62: #{fwd.1} parent=1 // pred_check
      _
    $region63: #{fwd.1} parent=1 // pred_check_branch
      %2032 = sbr.rel (0) target = $region65
    $region64: #{fwd.1} parent=1 // pred_region
      %2033 = dma.done [#allocation6], 16
    $region65: #{fwd.1} parent=1 // pred_fallthru
      _
    %2034 = sfence
    %2035 = vsyncpa [#allocation4], 1
    %2036 = vsyncpa [#allocation5], 1
    %2037 = vsyncpa [#allocation6], 1

</llo_original>
